<compile_context>
chip_gen: v6e
topology: v6e:2x2x1
jax: 0.10.0
libtpu: 0.0.40
codegen_flags: <defaults>
</compile_context>

<pallas_src>
import math
from functools import partial

import jax
import jax.numpy as jnp
import numpy as np
from jax import lax
from jax.experimental import pallas as pl
from jax.experimental.pallas import tpu as pltpu


# Contract axis 1 of lhs with axis 1 of rhs: (M, K) x (N, K) -> (M, N).
# Consumes torch Linear weights (out_features, in_features) directly on the
# MXU -- no XLU transpose, no W.T materialized in VMEM.
_CONTRACT_IN = (((1,), (1,)), ((), ()))


def _mxu(a, b):
    """bf16 x bf16 -> f32 matmul contracting the last axis of both operands."""
    return lax.dot_general(a.astype(jnp.bfloat16), b.astype(jnp.bfloat16),
                           dimension_numbers=_CONTRACT_IN,
                           preferred_element_type=jnp.float32)


def _block_kernel(xq_ref, xk_ref, wq_ref, wkv_ref, wo_ref,
                  w1_ref, b1_ref, w2_ref, b2_ref,
                  g1_ref, be1_ref, g2_ref, be2_ref,
                  o_ref,
                  q_sc, m_sc, l_sc, acc_sc,
                  *, num_heads, head_dim, f_tile, eps):
    qi = pl.program_id(1)
    kv = pl.program_id(2)
    nkv = pl.num_programs(2)

    _, tq, D = xq_ref.shape
    _, tk, _ = xk_ref.shape
    H, Dh = num_heads, head_dim
    F = w1_ref.shape[0]
    scale = 1.0 / math.sqrt(Dh)

    # ---- first kv step for this (b, q-tile): project q, reset softmax state
    @pl.when(kv == 0)
    def _init():
        q_sc[...] = _mxu(xq_ref[0], wq_ref[...]) * scale      # (tq, D) f32
        m_sc[...] = jnp.full(m_sc.shape, -jnp.inf, m_sc.dtype)
        l_sc[...] = jnp.zeros(l_sc.shape, l_sc.dtype)
        acc_sc[...] = jnp.zeros(acc_sc.shape, acc_sc.dtype)

    # ---- online-softmax accumulation; skip fully-masked (above-diag) tiles
    q_end = qi * tq + (tq - 1)

    @pl.when(kv * tk <= q_end)
    def _attend():
        kvp = _mxu(xk_ref[0], wkv_ref[...])                    # (tk, 2D) f32
        kk = kvp[:, :D]
        vv = kvp[:, D:]

        # tile-local causal mask from grid offsets (large finite, not -inf)
        row = qi * tq + lax.broadcasted_iota(jnp.int32, (tq, tk), 0)
        col = kv * tk + lax.broadcasted_iota(jnp.int32, (tq, tk), 1)
        causal = col <= row

        q = q_sc[...]                                          # scale folded in
        for h in range(H):                                     # H static & small
            sl = slice(h * Dh, (h + 1) * Dh)
            s = _mxu(q[:, sl], kk[:, sl])                      # (tq, tk) = q k^T
            s = jnp.where(causal, s, -1e30)
            m_old = m_sc[h]                                    # (tq, 1)
            m_new = jnp.maximum(m_old, jnp.max(s, axis=-1, keepdims=True))
            alpha = jnp.exp(m_old - m_new)
            p = jnp.exp(s - m_new)                             # f32 (EUP)
            l_sc[h] = alpha * l_sc[h] + jnp.sum(p, axis=-1, keepdims=True)
            acc_sc[:, sl] = alpha * acc_sc[:, sl] + jnp.dot(
                p.astype(jnp.bfloat16), vv[:, sl].astype(jnp.bfloat16),
                preferred_element_type=jnp.float32)
            m_sc[h] = m_new

    # ---- last kv step: o-projection (one K=D matmul), residuals, LN, MLP ----
    @pl.when(kv == nkv - 1)
    def _finalize():
        # normalize each head's accumulator in place, then a single matmul
        for h in range(H):
            sl = slice(h * Dh, (h + 1) * Dh)
            acc_sc[:, sl] = acc_sc[:, sl] * pl.reciprocal(l_sc[h], approx=True)
        attn = _mxu(acc_sc[...], wo_ref[...])                  # (tq, D) f32

        def layer_norm(y, gamma, beta):
            mean = jnp.mean(y, axis=-1, keepdims=True)
            var = jnp.mean(jnp.square(y - mean), axis=-1, keepdims=True)
            return (y - mean) * lax.rsqrt(var + eps) * gamma[None, :] + beta[None, :]

        x = xq_ref[0]                                          # (tq, D) f32
        h1 = layer_norm(x + attn, g1_ref[0], be1_ref[0])

        # MLP tiled over the ff dimension: Linear -> (Dropout=id) -> GELU -> Linear
        b1 = b1_ref[0]                                         # (F,)
        z_acc = jnp.zeros((tq, D), jnp.float32)
        for fi in range(F // f_tile):                          # static chunks
            f0 = fi * f_tile
            z = _mxu(h1, w1_ref[f0:f0 + f_tile, :]) + b1[f0:f0 + f_tile][None, :]
            # tanh-approx GELU (tanh on the EUP; erf polynomial would burn VALU)
            z = 0.5 * z * (1.0 + jnp.tanh(
                0.7978845608028654 * (z + 0.044715 * z * z * z)))
            z_acc = z_acc + _mxu(z, w2_ref[:, f0:f0 + f_tile])
        z_acc = z_acc + b2_ref[0][None, :]

        o_ref[0] = layer_norm(h1 + z_acc, g2_ref[0], be2_ref[0]).astype(o_ref.dtype)


def block_forward(x, params, *, num_heads, q_tile=256, kv_tile=256, f_tile=512):
    """x: (B, S, D) float32. params: dict of torch-Linear-layout f32 weights."""
    B, S, D = x.shape
    F = params["w1"].shape[0]
    assert D % num_heads == 0
    Dh = D // num_heads

    tq = min(q_tile, S)
    tk = min(kv_tile, S)
    tf = min(f_tile, F)
    assert S % tq == 0 and S % tk == 0 and F % tf == 0
    nq, nkv = S // tq, S // tk

    # bf16 weight matrices (halved VMEM/DMA, MXU-native); biases / LN stay f32.
    bf = lambda w: w.astype(jnp.bfloat16)
    wqkv = params["wqkv"]
    wq, wkv = bf(wqkv[:D]), bf(wqkv[D:])

    # Grid-invariant weight blocks (constant index_map): DMA'd once, revisited.
    full = lambda shape: pl.BlockSpec(shape, lambda b, qi, kv: (0,) * len(shape))

    kernel = partial(_block_kernel, num_heads=num_heads, head_dim=Dh,
                     f_tile=tf, eps=1e-5)

    flops = (2 * B * S * D * (3 * D)          # qkv projections
             + 4 * B * S * S * D              # qk^T and pv
             + 2 * B * S * D * D              # o-projection
             + 4 * B * S * D * F)             # mlp
    transcendentals = B * num_heads * S * S + B * S * F + 4 * B * S
    bytes_accessed = (3 * B * S * D * 4                       # x (read x2) + out
                      + 2 * (4 * D * D + 2 * D * F)           # bf16 weights
                      + 4 * (F + 5 * D))                      # biases / LN affine

    return pl.pallas_call(
        kernel,
        out_shape=jax.ShapeDtypeStruct((B, S, D), jnp.float32),
        grid_spec=pltpu.PrefetchScalarGridSpec(
            num_scalar_prefetch=0,
            grid=(B, nq, nkv),
            in_specs=[
                pl.BlockSpec((1, tq, D), lambda b, qi, kv: (b, qi, 0)),  # x (q rows)
                pl.BlockSpec((1, tk, D), lambda b, qi, kv: (b, kv, 0)),  # x (kv rows)
                full((D, D)),          # wq   (bf16)
                full((2 * D, D)),      # wkv  (bf16)
                full((D, D)),          # wo   (bf16)
                full((F, D)),          # w1   (bf16)
                full((1, F)),          # b1   (f32)
                full((D, F)),          # w2   (bf16)
                full((1, D)),          # b2
                full((1, D)),          # gamma1
                full((1, D)),          # beta1
                full((1, D)),          # gamma2
                full((1, D)),          # beta2
            ],
            out_specs=pl.BlockSpec((1, tq, D), lambda b, qi, kv: (b, qi, 0)),
            scratch_shapes=[
                pltpu.VMEM((tq, D), jnp.float32),               # q (scaled)
                pltpu.VMEM((num_heads, tq, 1), jnp.float32),    # running max
                pltpu.VMEM((num_heads, tq, 1), jnp.float32),    # running denom
                pltpu.VMEM((tq, D), jnp.float32),               # PV accumulator
            ]),
        compiler_params=pltpu.CompilerParams(
            dimension_semantics=("parallel", "parallel", "arbitrary"),
            vmem_limit_bytes=48 * 1024 * 1024),
        cost_estimate=pl.CostEstimate(flops=flops,
                                      transcendentals=transcendentals,
                                      bytes_accessed=bytes_accessed),
    )(x, x, wq, wkv, bf(params["wo"]), bf(params["w1"]), params["b1"],
      bf(params["w2"]), params["b2"], params["gamma1"], params["beta1"],
      params["gamma2"], params["beta2"])


# ---- pure-JAX f32 reference (for correctness check) ------------------------
def block_reference(x, p, *, num_heads):
    B, S, D = x.shape
    H = num_heads
    Dh = D // H
    qkv = x @ p["wqkv"].T
    q, k, v = qkv[..., :D], qkv[..., D:2 * D], qkv[..., 2 * D:]
    q = q.reshape(B, S, H, Dh)
    k = k.reshape(B, S, H, Dh)
    v = v.reshape(B, S, H, Dh)
    qk = jnp.einsum("bihd,bjhd->bhij", q, k) / math.sqrt(Dh)
    mask = jnp.tril(jnp.ones((S, S)))[None, None]
    qk = jnp.where(mask == 0, -jnp.inf, qk)
    scores = jax.nn.softmax(qk, axis=-1)
    attn = jnp.einsum("bhij,bjhd->bihd", scores, v).reshape(B, S, D)
    attn = attn @ p["wo"].T

    def ln(y, g, b):
        mean = jnp.mean(y, -1, keepdims=True)
        var = jnp.mean((y - mean) ** 2, -1, keepdims=True)
        return (y - mean) / jnp.sqrt(var + 1e-5) * g[0] + b[0]

    h1 = ln(x + attn, p["gamma1"], p["beta1"])
    z = h1 @ p["w1"].T + p["b1"][0]
    z = 0.5 * z * (1.0 + jax.lax.erf(z / jnp.sqrt(2.0)))
    z = z @ p["w2"].T + p["b2"][0]
    return ln(h1 + z, p["gamma2"], p["beta2"])


if __name__ == "__main__":
    B, S, D, FF, H = 2, 8, 32, 64, 2   # batch, seq, hidden, ff_dim, num_heads

    ks = jax.random.split(jax.random.PRNGKey(0), 7)
    params = {
        "wqkv":   0.02 * jax.random.normal(ks[0], (3 * D, D), jnp.float32),
        "wo":     0.02 * jax.random.normal(ks[1], (D, D), jnp.float32),
        "w1":     0.02 * jax.random.normal(ks[2], (FF, D), jnp.float32),
        "b1":     0.01 * jax.random.normal(ks[3], (1, FF), jnp.float32),
        "w2":     0.02 * jax.random.normal(ks[4], (D, FF), jnp.float32),
        "b2":     0.01 * jax.random.normal(ks[5], (1, D), jnp.float32),
        "gamma1": jnp.ones((1, D), jnp.float32),
        "beta1":  jnp.zeros((1, D), jnp.float32),
        "gamma2": jnp.ones((1, D), jnp.float32),
        "beta2":  jnp.zeros((1, D), jnp.float32),
    }
    x = jax.random.normal(ks[6], (B, S, D), jnp.float32)

    out = jax.block_until_ready(block_forward(x, params, num_heads=H))

    ref = block_reference(x, params, num_heads=H)
    assert out.shape == (B, S, D)
    # bf16 MXU operands (f32 accumulation) + tanh-approx GELU -> loose tolerance.
    np.testing.assert_allclose(np.asarray(out), np.asarray(ref),
                               rtol=2e-2, atol=2e-2)
    print("KERNEL_OK")
</pallas_src>

<mosaic_0001>
module attributes {stable_mosaic.version = 11 : i64} {
  func.func @_block_kernel(%arg0: i32, %arg1: i32, %arg2: i32, %arg3: memref<1x8x32xf32, #tpu.memory_space<vmem>>, %arg4: memref<1x8x32xf32, #tpu.memory_space<vmem>>, %arg5: memref<32x32xbf16, #tpu.memory_space<vmem>>, %arg6: memref<64x32xbf16, #tpu.memory_space<vmem>>, %arg7: memref<32x32xbf16, #tpu.memory_space<vmem>>, %arg8: memref<64x32xbf16, #tpu.memory_space<vmem>>, %arg9: memref<1x64xf32, #tpu.memory_space<vmem>>, %arg10: memref<32x64xbf16, #tpu.memory_space<vmem>>, %arg11: memref<1x32xf32, #tpu.memory_space<vmem>>, %arg12: memref<1x32xf32, #tpu.memory_space<vmem>>, %arg13: memref<1x32xf32, #tpu.memory_space<vmem>>, %arg14: memref<1x32xf32, #tpu.memory_space<vmem>>, %arg15: memref<1x32xf32, #tpu.memory_space<vmem>>, %arg16: memref<1x8x32xf32, #tpu.memory_space<vmem>>, %arg17: memref<8x32xf32, #tpu.memory_space<vmem>>, %arg18: memref<2x8x1xf32, #tpu.memory_space<vmem>>, %arg19: memref<2x8x1xf32, #tpu.memory_space<vmem>>, %arg20: memref<8x32xf32, #tpu.memory_space<vmem>>) attributes {dimension_semantics = [#tpu.dimension_semantics<parallel>, #tpu.dimension_semantics<parallel>, #tpu.dimension_semantics<arbitrary>], iteration_bounds = array<i64: 2, 1, 1>, scalar_prefetch = 0 : i64, scratch_operands = 4 : i64, tpu.core_type = #tpu.core_type<tc>, window_params = [{transform_indices = @transform_0, window_bounds = array<i64: 1, 8, 32>}, {transform_indices = @transform_1, window_bounds = array<i64: 1, 8, 32>}, {pipeline_mode = #tpu.pipeline_mode<synchronous>, transform_indices = @transform_2, window_bounds = array<i64: 32, 32>}, {pipeline_mode = #tpu.pipeline_mode<synchronous>, transform_indices = @transform_3, window_bounds = array<i64: 64, 32>}, {pipeline_mode = #tpu.pipeline_mode<synchronous>, transform_indices = @transform_4, window_bounds = array<i64: 32, 32>}, {pipeline_mode = #tpu.pipeline_mode<synchronous>, transform_indices = @transform_5, window_bounds = array<i64: 64, 32>}, {pipeline_mode = #tpu.pipeline_mode<synchronous>, transform_indices = @transform_6, window_bounds = array<i64: 1, 64>}, {pipeline_mode = #tpu.pipeline_mode<synchronous>, transform_indices = @transform_7, window_bounds = array<i64: 32, 64>}, {pipeline_mode = #tpu.pipeline_mode<synchronous>, transform_indices = @transform_8, window_bounds = array<i64: 1, 32>}, {pipeline_mode = #tpu.pipeline_mode<synchronous>, transform_indices = @transform_9, window_bounds = array<i64: 1, 32>}, {pipeline_mode = #tpu.pipeline_mode<synchronous>, transform_indices = @transform_10, window_bounds = array<i64: 1, 32>}, {pipeline_mode = #tpu.pipeline_mode<synchronous>, transform_indices = @transform_11, window_bounds = array<i64: 1, 32>}, {pipeline_mode = #tpu.pipeline_mode<synchronous>, transform_indices = @transform_12, window_bounds = array<i64: 1, 32>}, {transform_indices = @transform_13, window_bounds = array<i64: 1, 8, 32>}]} {
    %c0_i32 = arith.constant 0 : i32
    %0 = arith.cmpi eq, %arg2, %c0_i32 : i32
    %1 = arith.extui %0 : i1 to i32
    %c0_i32_0 = arith.constant 0 : i32
    %2 = arith.cmpi ne, %1, %c0_i32_0 : i32
    scf.if %2 {
      %c0 = arith.constant 0 : index
      %c0_5 = arith.constant 0 : index
      %c0_6 = arith.constant 0 : index
      %12 = vector.load %arg3[%c0, %c0_5, %c0_6] : memref<1x8x32xf32, #tpu.memory_space<vmem>>, vector<1x8x32xf32>
      %13 = vector.shape_cast %12 : vector<1x8x32xf32> to vector<8x32xf32>
      %c0_7 = arith.constant 0 : index
      %c0_8 = arith.constant 0 : index
      %14 = vector.load %arg5[%c0_7, %c0_8] : memref<32x32xbf16, #tpu.memory_space<vmem>>, vector<32x32xbf16>
      %15 = arith.truncf %13 : vector<8x32xf32> to vector<8x32xbf16>
      %cst = arith.constant dense<0.000000e+00> : vector<8x32xf32>
      %16 = tpu.matmul %15, %14, %cst {dimension_numbers = #tpu.dot_dimension_numbers<[1], [1], [0], [0], [0, 0, 1, 0], [], []>} : vector<8x32xbf16>, vector<32x32xbf16>, vector<8x32xf32> -> vector<8x32xf32>
      %cst_9 = arith.constant 2.500000e-01 : f32
      %17 = vector.broadcast %cst_9 : f32 to vector<8x32xf32>
      %18 = arith.mulf %16, %17 : vector<8x32xf32>
      %c0_10 = arith.constant 0 : index
      %c0_11 = arith.constant 0 : index
      %19 = vector.load %arg17[%c0_10, %c0_11] : memref<8x32xf32, #tpu.memory_space<vmem>>, vector<8x32xf32>
      tpu.vector_store %arg17[%c0_10, %c0_11], %18 {strides = array<i32>} : memref<8x32xf32, #tpu.memory_space<vmem>>, vector<8x32xf32>,
      %cst_12 = arith.constant 0xFF800000 : f32
      %20 = vector.broadcast %cst_12 : f32 to vector<2x8x1xf32>
      %c0_13 = arith.constant 0 : index
      %c0_14 = arith.constant 0 : index
      %c0_15 = arith.constant 0 : index
      %21 = vector.load %arg18[%c0_13, %c0_14, %c0_15] : memref<2x8x1xf32, #tpu.memory_space<vmem>>, vector<2x8x1xf32>
      tpu.vector_store %arg18[%c0_13, %c0_14, %c0_15], %20 {strides = array<i32>} : memref<2x8x1xf32, #tpu.memory_space<vmem>>, vector<2x8x1xf32>,
      %cst_16 = arith.constant 0.000000e+00 : f32
      %22 = vector.broadcast %cst_16 : f32 to vector<2x8x1xf32>
      %c0_17 = arith.constant 0 : index
      %c0_18 = arith.constant 0 : index
      %c0_19 = arith.constant 0 : index
      %23 = vector.load %arg19[%c0_17, %c0_18, %c0_19] : memref<2x8x1xf32, #tpu.memory_space<vmem>>, vector<2x8x1xf32>
      tpu.vector_store %arg19[%c0_17, %c0_18, %c0_19], %22 {strides = array<i32>} : memref<2x8x1xf32, #tpu.memory_space<vmem>>, vector<2x8x1xf32>,
      %cst_20 = arith.constant 0.000000e+00 : f32
      %24 = vector.broadcast %cst_20 : f32 to vector<8x32xf32>
      %c0_21 = arith.constant 0 : index
      %c0_22 = arith.constant 0 : index
      %25 = vector.load %arg20[%c0_21, %c0_22] : memref<8x32xf32, #tpu.memory_space<vmem>>, vector<8x32xf32>
      tpu.vector_store %arg20[%c0_21, %c0_22], %24 {strides = array<i32>} : memref<8x32xf32, #tpu.memory_space<vmem>>, vector<8x32xf32>,
    } else {
    }
    %c8_i32 = arith.constant 8 : i32
    %3 = arith.muli %arg1, %c8_i32 : i32
    %c7_i32 = arith.constant 7 : i32
    %4 = arith.addi %3, %c7_i32 : i32
    %c8_i32_1 = arith.constant 8 : i32
    %5 = arith.muli %arg2, %c8_i32_1 : i32
    %6 = arith.cmpi sle, %5, %4 : i32
    %7 = arith.extui %6 : i1 to i32
    %c0_i32_2 = arith.constant 0 : i32
    %8 = arith.cmpi ne, %7, %c0_i32_2 : i32
    scf.if %8 {
      %c0 = arith.constant 0 : index
      %c0_5 = arith.constant 0 : index
      %c0_6 = arith.constant 0 : index
      %12 = vector.load %arg4[%c0, %c0_5, %c0_6] : memref<1x8x32xf32, #tpu.memory_space<vmem>>, vector<1x8x32xf32>
      %13 = vector.shape_cast %12 : vector<1x8x32xf32> to vector<8x32xf32>
      %c0_7 = arith.constant 0 : index
      %c0_8 = arith.constant 0 : index
      %14 = vector.load %arg6[%c0_7, %c0_8] : memref<64x32xbf16, #tpu.memory_space<vmem>>, vector<64x32xbf16>
      %15 = arith.truncf %13 : vector<8x32xf32> to vector<8x32xbf16>
      %cst = arith.constant dense<0.000000e+00> : vector<8x64xf32>
      %16 = tpu.matmul %15, %14, %cst {dimension_numbers = #tpu.dot_dimension_numbers<[1], [1], [0], [0], [0, 0, 1, 0], [], []>} : vector<8x32xbf16>, vector<64x32xbf16>, vector<8x64xf32> -> vector<8x64xf32>
      %17 = vector.extract_strided_slice %16 {offsets = [0, 0], sizes = [8, 32], strides = [1, 1]} : vector<8x64xf32> to vector<8x32xf32>
      %18 = vector.extract_strided_slice %16 {offsets = [0, 32], sizes = [8, 32], strides = [1, 1]} : vector<8x64xf32> to vector<8x32xf32>
      %c8_i32_9 = arith.constant 8 : i32
      %19 = arith.muli %arg1, %c8_i32_9 : i32
      %20 = tpu.iota {dimensions = array<i32: 0>} : vector<8x8xi32>
      %21 = vector.broadcast %19 : i32 to vector<8x8xi32>
      %22 = arith.addi %21, %20 : vector<8x8xi32>
      %c8_i32_10 = arith.constant 8 : i32
      %23 = arith.muli %arg2, %c8_i32_10 : i32
      %24 = tpu.iota {dimensions = array<i32: 1>} : vector<8x8xi32>
      %25 = vector.broadcast %23 : i32 to vector<8x8xi32>
      %26 = arith.addi %25, %24 : vector<8x8xi32>
      %27 = arith.cmpi sle, %26, %22 : vector<8x8xi32>
      %c0_11 = arith.constant 0 : index
      %c0_12 = arith.constant 0 : index
      %28 = vector.load %arg17[%c0_11, %c0_12] : memref<8x32xf32, #tpu.memory_space<vmem>>, vector<8x32xf32>
      %29 = vector.extract_strided_slice %28 {offsets = [0, 0], sizes = [8, 16], strides = [1, 1]} : vector<8x32xf32> to vector<8x16xf32>
      %30 = vector.extract_strided_slice %17 {offsets = [0, 0], sizes = [8, 16], strides = [1, 1]} : vector<8x32xf32> to vector<8x16xf32>
      %31 = arith.truncf %29 : vector<8x16xf32> to vector<8x16xbf16>
      %32 = arith.truncf %30 : vector<8x16xf32> to vector<8x16xbf16>
      %cst_13 = arith.constant dense<0.000000e+00> : vector<8x8xf32>
      %33 = tpu.matmul %31, %32, %cst_13 {dimension_numbers = #tpu.dot_dimension_numbers<[1], [1], [0], [0], [0, 0, 1, 0], [], []>} : vector<8x16xbf16>, vector<8x16xbf16>, vector<8x8xf32> -> vector<8x8xf32>
      %cst_14 = arith.constant -1.000000e+30 : f32
      %34 = vector.broadcast %cst_14 : f32 to vector<8x8xf32>
      %35 = arith.select %27, %33, %34 : vector<8x8xi1>, vector<8x8xf32>
      %c0_15 = arith.constant 0 : index
      %c0_16 = arith.constant 0 : index
      %c0_17 = arith.constant 0 : index
      %36 = vector.load %arg18[%c0_15, %c0_16, %c0_17] : memref<2x8x1xf32, #tpu.memory_space<vmem>>, vector<1x8x1xf32>
      %37 = vector.shape_cast %36 : vector<1x8x1xf32> to vector<8x1xf32>
      %cst_18 = arith.constant dense<0xFF800000> : vector<8xf32>
      %38 = vector.multi_reduction <maximumf>, %35, %cst_18 [1] : vector<8x8xf32> to vector<8xf32>
      %39 = vector.shape_cast %38 : vector<8xf32> to vector<8x1xf32>
      %40 = arith.maximumf %37, %39 : vector<8x1xf32>
      %41 = arith.subf %37, %40 : vector<8x1xf32>
      %42 = math.exp %41 : vector<8x1xf32>
      %43 = vector.broadcast %40 : vector<8x1xf32> to vector<8x8xf32>
      %44 = arith.subf %35, %43 : vector<8x8xf32>
      %45 = math.exp %44 : vector<8x8xf32>
      %c0_19 = arith.constant 0 : index
      %c0_20 = arith.constant 0 : index
      %c0_21 = arith.constant 0 : index
      %46 = vector.load %arg19[%c0_19, %c0_20, %c0_21] : memref<2x8x1xf32, #tpu.memory_space<vmem>>, vector<1x8x1xf32>
      %47 = vector.shape_cast %46 : vector<1x8x1xf32> to vector<8x1xf32>
      %48 = arith.mulf %42, %47 : vector<8x1xf32>
      %cst_22 = arith.constant dense<0.000000e+00> : vector<8xf32>
      %49 = vector.multi_reduction <add>, %45, %cst_22 [1] : vector<8x8xf32> to vector<8xf32>
      %50 = vector.shape_cast %49 : vector<8xf32> to vector<8x1xf32>
      %51 = arith.addf %48, %50 : vector<8x1xf32>
      %c0_23 = arith.constant 0 : index
      %c0_24 = arith.constant 0 : index
      %c0_25 = arith.constant 0 : index
      %52 = vector.load %arg19[%c0_23, %c0_24, %c0_25] : memref<2x8x1xf32, #tpu.memory_space<vmem>>, vector<1x8x1xf32>
      %53 = vector.shape_cast %52 : vector<1x8x1xf32> to vector<8x1xf32>
      %54 = vector.shape_cast %51 : vector<8x1xf32> to vector<1x8x1xf32>
      tpu.vector_store %arg19[%c0_23, %c0_24, %c0_25], %54 {strides = array<i32>} : memref<2x8x1xf32, #tpu.memory_space<vmem>>, vector<1x8x1xf32>,
      %c0_26 = arith.constant 0 : index
      %c0_27 = arith.constant 0 : index
      %55 = vector.load %arg20[%c0_26, %c0_27] : memref<8x32xf32, #tpu.memory_space<vmem>>, vector<8x16xf32>
      %56 = vector.broadcast %42 : vector<8x1xf32> to vector<8x16xf32>
      %57 = arith.mulf %56, %55 : vector<8x16xf32>
      %58 = arith.truncf %45 : vector<8x8xf32> to vector<8x8xbf16>
      %59 = vector.extract_strided_slice %18 {offsets = [0, 0], sizes = [8, 16], strides = [1, 1]} : vector<8x32xf32> to vector<8x16xf32>
      %60 = arith.truncf %59 : vector<8x16xf32> to vector<8x16xbf16>
      %cst_28 = arith.constant dense<0.000000e+00> : vector<8x16xf32>
      %61 = tpu.matmul %58, %60, %cst_28 {dimension_numbers = #tpu.dot_dimension_numbers<[1], [0], [0], [1], [0, 0, 1, 1], [], []>} : vector<8x8xbf16>, vector<8x16xbf16>, vector<8x16xf32> -> vector<8x16xf32>
      %62 = arith.addf %57, %61 : vector<8x16xf32>
      %c0_29 = arith.constant 0 : index
      %c0_30 = arith.constant 0 : index
      %63 = vector.load %arg20[%c0_29, %c0_30] : memref<8x32xf32, #tpu.memory_space<vmem>>, vector<8x16xf32>
      tpu.vector_store %arg20[%c0_29, %c0_30], %62 {strides = array<i32>} : memref<8x32xf32, #tpu.memory_space<vmem>>, vector<8x16xf32>,
      %c0_31 = arith.constant 0 : index
      %c0_32 = arith.constant 0 : index
      %c0_33 = arith.constant 0 : index
      %64 = vector.load %arg18[%c0_31, %c0_32, %c0_33] : memref<2x8x1xf32, #tpu.memory_space<vmem>>, vector<1x8x1xf32>
      %65 = vector.shape_cast %64 : vector<1x8x1xf32> to vector<8x1xf32>
      %66 = vector.shape_cast %40 : vector<8x1xf32> to vector<1x8x1xf32>
      tpu.vector_store %arg18[%c0_31, %c0_32, %c0_33], %66 {strides = array<i32>} : memref<2x8x1xf32, #tpu.memory_space<vmem>>, vector<1x8x1xf32>,
      %67 = vector.extract_strided_slice %28 {offsets = [0, 16], sizes = [8, 16], strides = [1, 1]} : vector<8x32xf32> to vector<8x16xf32>
      %68 = vector.extract_strided_slice %17 {offsets = [0, 16], sizes = [8, 16], strides = [1, 1]} : vector<8x32xf32> to vector<8x16xf32>
      %69 = arith.truncf %67 : vector<8x16xf32> to vector<8x16xbf16>
      %70 = arith.truncf %68 : vector<8x16xf32> to vector<8x16xbf16>
      %cst_34 = arith.constant dense<0.000000e+00> : vector<8x8xf32>
      %71 = tpu.matmul %69, %70, %cst_34 {dimension_numbers = #tpu.dot_dimension_numbers<[1], [1], [0], [0], [0, 0, 1, 0], [], []>} : vector<8x16xbf16>, vector<8x16xbf16>, vector<8x8xf32> -> vector<8x8xf32>
      %cst_35 = arith.constant -1.000000e+30 : f32
      %72 = vector.broadcast %cst_35 : f32 to vector<8x8xf32>
      %73 = arith.select %27, %71, %72 : vector<8x8xi1>, vector<8x8xf32>
      %c1 = arith.constant 1 : index
      %c0_36 = arith.constant 0 : index
      %c0_37 = arith.constant 0 : index
      %74 = vector.load %arg18[%c1, %c0_36, %c0_37] : memref<2x8x1xf32, #tpu.memory_space<vmem>>, vector<1x8x1xf32>
      %75 = vector.shape_cast %74 : vector<1x8x1xf32> to vector<8x1xf32>
      %cst_38 = arith.constant dense<0xFF800000> : vector<8xf32>
      %76 = vector.multi_reduction <maximumf>, %73, %cst_38 [1] : vector<8x8xf32> to vector<8xf32>
      %77 = vector.shape_cast %76 : vector<8xf32> to vector<8x1xf32>
      %78 = arith.maximumf %75, %77 : vector<8x1xf32>
      %79 = arith.subf %75, %78 : vector<8x1xf32>
      %80 = math.exp %79 : vector<8x1xf32>
      %81 = vector.broadcast %78 : vector<8x1xf32> to vector<8x8xf32>
      %82 = arith.subf %73, %81 : vector<8x8xf32>
      %83 = math.exp %82 : vector<8x8xf32>
      %c1_39 = arith.constant 1 : index
      %c0_40 = arith.constant 0 : index
      %c0_41 = arith.constant 0 : index
      %84 = vector.load %arg19[%c1_39, %c0_40, %c0_41] : memref<2x8x1xf32, #tpu.memory_space<vmem>>, vector<1x8x1xf32>
      %85 = vector.shape_cast %84 : vector<1x8x1xf32> to vector<8x1xf32>
      %86 = arith.mulf %80, %85 : vector<8x1xf32>
      %cst_42 = arith.constant dense<0.000000e+00> : vector<8xf32>
      %87 = vector.multi_reduction <add>, %83, %cst_42 [1] : vector<8x8xf32> to vector<8xf32>
      %88 = vector.shape_cast %87 : vector<8xf32> to vector<8x1xf32>
      %89 = arith.addf %86, %88 : vector<8x1xf32>
      %c1_43 = arith.constant 1 : index
      %c0_44 = arith.constant 0 : index
      %c0_45 = arith.constant 0 : index
      %90 = vector.load %arg19[%c1_43, %c0_44, %c0_45] : memref<2x8x1xf32, #tpu.memory_space<vmem>>, vector<1x8x1xf32>
      %91 = vector.shape_cast %90 : vector<1x8x1xf32> to vector<8x1xf32>
      %92 = vector.shape_cast %89 : vector<8x1xf32> to vector<1x8x1xf32>
      tpu.vector_store %arg19[%c1_43, %c0_44, %c0_45], %92 {strides = array<i32>} : memref<2x8x1xf32, #tpu.memory_space<vmem>>, vector<1x8x1xf32>,
      %c0_46 = arith.constant 0 : index
      %c16 = arith.constant 16 : index
      %93 = vector.load %arg20[%c0_46, %c16] : memref<8x32xf32, #tpu.memory_space<vmem>>, vector<8x16xf32>
      %94 = vector.broadcast %80 : vector<8x1xf32> to vector<8x16xf32>
      %95 = arith.mulf %94, %93 : vector<8x16xf32>
      %96 = arith.truncf %83 : vector<8x8xf32> to vector<8x8xbf16>
      %97 = vector.extract_strided_slice %18 {offsets = [0, 16], sizes = [8, 16], strides = [1, 1]} : vector<8x32xf32> to vector<8x16xf32>
      %98 = arith.truncf %97 : vector<8x16xf32> to vector<8x16xbf16>
      %cst_47 = arith.constant dense<0.000000e+00> : vector<8x16xf32>
      %99 = tpu.matmul %96, %98, %cst_47 {dimension_numbers = #tpu.dot_dimension_numbers<[1], [0], [0], [1], [0, 0, 1, 1], [], []>} : vector<8x8xbf16>, vector<8x16xbf16>, vector<8x16xf32> -> vector<8x16xf32>
      %100 = arith.addf %95, %99 : vector<8x16xf32>
      %c0_48 = arith.constant 0 : index
      %c16_49 = arith.constant 16 : index
      %101 = vector.load %arg20[%c0_48, %c16_49] : memref<8x32xf32, #tpu.memory_space<vmem>>, vector<8x16xf32>
      tpu.vector_store %arg20[%c0_48, %c16_49], %100 {strides = array<i32>} : memref<8x32xf32, #tpu.memory_space<vmem>>, vector<8x16xf32>,
      %c1_50 = arith.constant 1 : index
      %c0_51 = arith.constant 0 : index
      %c0_52 = arith.constant 0 : index
      %102 = vector.load %arg18[%c1_50, %c0_51, %c0_52] : memref<2x8x1xf32, #tpu.memory_space<vmem>>, vector<1x8x1xf32>
      %103 = vector.shape_cast %102 : vector<1x8x1xf32> to vector<8x1xf32>
      %104 = vector.shape_cast %78 : vector<8x1xf32> to vector<1x8x1xf32>
      tpu.vector_store %arg18[%c1_50, %c0_51, %c0_52], %104 {strides = array<i32>} : memref<2x8x1xf32, #tpu.memory_space<vmem>>, vector<1x8x1xf32>,
    } else {
    }
    %c0_i32_3 = arith.constant 0 : i32
    %9 = arith.cmpi eq, %arg2, %c0_i32_3 : i32
    %10 = arith.extui %9 : i1 to i32
    %c0_i32_4 = arith.constant 0 : i32
    %11 = arith.cmpi ne, %10, %c0_i32_4 : i32
    scf.if %11 {
      %c0 = arith.constant 0 : index
      %c0_5 = arith.constant 0 : index
      %12 = vector.load %arg20[%c0, %c0_5] : memref<8x32xf32, #tpu.memory_space<vmem>>, vector<8x16xf32>
      %c0_6 = arith.constant 0 : index
      %c0_7 = arith.constant 0 : index
      %c0_8 = arith.constant 0 : index
      %13 = vector.load %arg19[%c0_6, %c0_7, %c0_8] : memref<2x8x1xf32, #tpu.memory_space<vmem>>, vector<1x8x1xf32>
      %14 = vector.shape_cast %13 : vector<1x8x1xf32> to vector<8x1xf32>
      %15 = tpu.reciprocal %14 {approx = true} : vector<8x1xf32> -> vector<8x1xf32>
      %16 = vector.broadcast %15 : vector<8x1xf32> to vector<8x16xf32>
      %17 = arith.mulf %12, %16 : vector<8x16xf32>
      %c0_9 = arith.constant 0 : index
      %c0_10 = arith.constant 0 : index
      %18 = vector.load %arg20[%c0_9, %c0_10] : memref<8x32xf32, #tpu.memory_space<vmem>>, vector<8x16xf32>
      tpu.vector_store %arg20[%c0_9, %c0_10], %17 {strides = array<i32>} : memref<8x32xf32, #tpu.memory_space<vmem>>, vector<8x16xf32>,
      %c0_11 = arith.constant 0 : index
      %c16 = arith.constant 16 : index
      %19 = vector.load %arg20[%c0_11, %c16] : memref<8x32xf32, #tpu.memory_space<vmem>>, vector<8x16xf32>
      %c1 = arith.constant 1 : index
      %c0_12 = arith.constant 0 : index
      %c0_13 = arith.constant 0 : index
      %20 = vector.load %arg19[%c1, %c0_12, %c0_13] : memref<2x8x1xf32, #tpu.memory_space<vmem>>, vector<1x8x1xf32>
      %21 = vector.shape_cast %20 : vector<1x8x1xf32> to vector<8x1xf32>
      %22 = tpu.reciprocal %21 {approx = true} : vector<8x1xf32> -> vector<8x1xf32>
      %23 = vector.broadcast %22 : vector<8x1xf32> to vector<8x16xf32>
      %24 = arith.mulf %19, %23 : vector<8x16xf32>
      %c0_14 = arith.constant 0 : index
      %c16_15 = arith.constant 16 : index
      %25 = vector.load %arg20[%c0_14, %c16_15] : memref<8x32xf32, #tpu.memory_space<vmem>>, vector<8x16xf32>
      tpu.vector_store %arg20[%c0_14, %c16_15], %24 {strides = array<i32>} : memref<8x32xf32, #tpu.memory_space<vmem>>, vector<8x16xf32>,
      %c0_16 = arith.constant 0 : index
      %c0_17 = arith.constant 0 : index
      %26 = vector.load %arg20[%c0_16, %c0_17] : memref<8x32xf32, #tpu.memory_space<vmem>>, vector<8x32xf32>
      %c0_18 = arith.constant 0 : index
      %c0_19 = arith.constant 0 : index
      %27 = vector.load %arg7[%c0_18, %c0_19] : memref<32x32xbf16, #tpu.memory_space<vmem>>, vector<32x32xbf16>
      %28 = arith.truncf %26 : vector<8x32xf32> to vector<8x32xbf16>
      %cst = arith.constant dense<0.000000e+00> : vector<8x32xf32>
      %29 = tpu.matmul %28, %27, %cst {dimension_numbers = #tpu.dot_dimension_numbers<[1], [1], [0], [0], [0, 0, 1, 0], [], []>} : vector<8x32xbf16>, vector<32x32xbf16>, vector<8x32xf32> -> vector<8x32xf32>
      %c0_20 = arith.constant 0 : index
      %c0_21 = arith.constant 0 : index
      %c0_22 = arith.constant 0 : index
      %30 = vector.load %arg3[%c0_20, %c0_21, %c0_22] : memref<1x8x32xf32, #tpu.memory_space<vmem>>, vector<1x8x32xf32>
      %31 = vector.shape_cast %30 : vector<1x8x32xf32> to vector<8x32xf32>
      %32 = arith.addf %31, %29 : vector<8x32xf32>
      %c0_23 = arith.constant 0 : index
      %c0_24 = arith.constant 0 : index
      %33 = vector.load %arg12[%c0_23, %c0_24] : memref<1x32xf32, #tpu.memory_space<vmem>>, vector<1x32xf32>
      %34 = vector.shape_cast %33 : vector<1x32xf32> to vector<32xf32>
      %c0_25 = arith.constant 0 : index
      %c0_26 = arith.constant 0 : index
      %35 = vector.load %arg13[%c0_25, %c0_26] : memref<1x32xf32, #tpu.memory_space<vmem>>, vector<1x32xf32>
      %36 = vector.shape_cast %35 : vector<1x32xf32> to vector<32xf32>
      %cst_27 = arith.constant dense<0.000000e+00> : vector<8xf32>
      %37 = vector.multi_reduction <add>, %32, %cst_27 [1] : vector<8x32xf32> to vector<8xf32>
      %38 = vector.shape_cast %37 : vector<8xf32> to vector<8x1xf32>
      %cst_28 = arith.constant 3.200000e+01 : f32
      %39 = vector.broadcast %cst_28 : f32 to vector<8x1xf32>
      %40 = arith.divf %38, %39 : vector<8x1xf32>
      %41 = vector.broadcast %40 : vector<8x1xf32> to vector<8x32xf32>
      %42 = arith.subf %32, %41 : vector<8x32xf32>
      %43 = arith.mulf %42, %42 : vector<8x32xf32>
      %cst_29 = arith.constant dense<0.000000e+00> : vector<8xf32>
      %44 = vector.multi_reduction <add>, %43, %cst_29 [1] : vector<8x32xf32> to vector<8xf32>
      %45 = vector.shape_cast %44 : vector<8xf32> to vector<8x1xf32>
      %cst_30 = arith.constant 3.200000e+01 : f32
      %46 = vector.broadcast %cst_30 : f32 to vector<8x1xf32>
      %47 = arith.divf %45, %46 : vector<8x1xf32>
      %48 = vector.broadcast %40 : vector<8x1xf32> to vector<8x32xf32>
      %49 = arith.subf %32, %48 : vector<8x32xf32>
      %cst_31 = arith.constant 9.99999974E-6 : f32
      %50 = vector.broadcast %cst_31 : f32 to vector<8x1xf32>
      %51 = arith.addf %47, %50 : vector<8x1xf32>
      %52 = math.rsqrt %51 : vector<8x1xf32>
      %53 = vector.broadcast %52 : vector<8x1xf32> to vector<8x32xf32>
      %54 = arith.mulf %49, %53 : vector<8x32xf32>
      %55 = vector.shape_cast %34 : vector<32xf32> to vector<1x32xf32>
      %56 = vector.broadcast %55 : vector<1x32xf32> to vector<8x32xf32>
      %57 = arith.mulf %54, %56 : vector<8x32xf32>
      %58 = vector.shape_cast %36 : vector<32xf32> to vector<1x32xf32>
      %59 = vector.broadcast %58 : vector<1x32xf32> to vector<8x32xf32>
      %60 = arith.addf %57, %59 : vector<8x32xf32>
      %c0_32 = arith.constant 0 : index
      %c0_33 = arith.constant 0 : index
      %61 = vector.load %arg9[%c0_32, %c0_33] : memref<1x64xf32, #tpu.memory_space<vmem>>, vector<1x64xf32>
      %62 = vector.shape_cast %61 : vector<1x64xf32> to vector<64xf32>
      %cst_34 = arith.constant 0.000000e+00 : f32
      %63 = vector.broadcast %cst_34 : f32 to vector<8x32xf32>
      %c0_35 = arith.constant 0 : index
      %c0_36 = arith.constant 0 : index
      %64 = vector.load %arg8[%c0_35, %c0_36] : memref<64x32xbf16, #tpu.memory_space<vmem>>, vector<64x32xbf16>
      %65 = arith.truncf %60 : vector<8x32xf32> to vector<8x32xbf16>
      %cst_37 = arith.constant dense<0.000000e+00> : vector<8x64xf32>
      %66 = tpu.matmul %65, %64, %cst_37 {dimension_numbers = #tpu.dot_dimension_numbers<[1], [1], [0], [0], [0, 0, 1, 0], [], []>} : vector<8x32xbf16>, vector<64x32xbf16>, vector<8x64xf32> -> vector<8x64xf32>
      %67 = vector.shape_cast %62 : vector<64xf32> to vector<1x64xf32>
      %68 = vector.broadcast %67 : vector<1x64xf32> to vector<8x64xf32>
      %69 = arith.addf %66, %68 : vector<8x64xf32>
      %cst_38 = arith.constant 5.000000e-01 : f32
      %70 = vector.broadcast %cst_38 : f32 to vector<8x64xf32>
      %71 = arith.mulf %70, %69 : vector<8x64xf32>
      %cst_39 = arith.constant 4.471500e-02 : f32
      %72 = vector.broadcast %cst_39 : f32 to vector<8x64xf32>
      %73 = arith.mulf %72, %69 : vector<8x64xf32>
      %74 = arith.mulf %73, %69 : vector<8x64xf32>
      %75 = arith.mulf %74, %69 : vector<8x64xf32>
      %76 = arith.addf %69, %75 : vector<8x64xf32>
      %cst_40 = arith.constant 0.797884583 : f32
      %77 = vector.broadcast %cst_40 : f32 to vector<8x64xf32>
      %78 = arith.mulf %77, %76 : vector<8x64xf32>
      %79 = math.tanh %78 : vector<8x64xf32>
      %cst_41 = arith.constant 1.000000e+00 : f32
      %80 = vector.broadcast %cst_41 : f32 to vector<8x64xf32>
      %81 = arith.addf %80, %79 : vector<8x64xf32>
      %82 = arith.mulf %71, %81 : vector<8x64xf32>
      %c0_42 = arith.constant 0 : index
      %c0_43 = arith.constant 0 : index
      %83 = vector.load %arg10[%c0_42, %c0_43] : memref<32x64xbf16, #tpu.memory_space<vmem>>, vector<32x64xbf16>
      %84 = arith.truncf %82 : vector<8x64xf32> to vector<8x64xbf16>
      %cst_44 = arith.constant dense<0.000000e+00> : vector<8x32xf32>
      %85 = tpu.matmul %84, %83, %cst_44 {dimension_numbers = #tpu.dot_dimension_numbers<[1], [1], [0], [0], [0, 0, 1, 0], [], []>} : vector<8x64xbf16>, vector<32x64xbf16>, vector<8x32xf32> -> vector<8x32xf32>
      %86 = arith.addf %63, %85 : vector<8x32xf32>
      %c0_45 = arith.constant 0 : index
      %c0_46 = arith.constant 0 : index
      %87 = vector.load %arg11[%c0_45, %c0_46] : memref<1x32xf32, #tpu.memory_space<vmem>>, vector<1x32xf32>
      %88 = vector.shape_cast %87 : vector<1x32xf32> to vector<32xf32>
      %89 = vector.shape_cast %88 : vector<32xf32> to vector<1x32xf32>
      %90 = vector.broadcast %89 : vector<1x32xf32> to vector<8x32xf32>
      %91 = arith.addf %86, %90 : vector<8x32xf32>
      %92 = arith.addf %60, %91 : vector<8x32xf32>
      %c0_47 = arith.constant 0 : index
      %c0_48 = arith.constant 0 : index
      %93 = vector.load %arg14[%c0_47, %c0_48] : memref<1x32xf32, #tpu.memory_space<vmem>>, vector<1x32xf32>
      %94 = vector.shape_cast %93 : vector<1x32xf32> to vector<32xf32>
      %c0_49 = arith.constant 0 : index
      %c0_50 = arith.constant 0 : index
      %95 = vector.load %arg15[%c0_49, %c0_50] : memref<1x32xf32, #tpu.memory_space<vmem>>, vector<1x32xf32>
      %96 = vector.shape_cast %95 : vector<1x32xf32> to vector<32xf32>
      %cst_51 = arith.constant dense<0.000000e+00> : vector<8xf32>
      %97 = vector.multi_reduction <add>, %92, %cst_51 [1] : vector<8x32xf32> to vector<8xf32>
      %98 = vector.shape_cast %97 : vector<8xf32> to vector<8x1xf32>
      %cst_52 = arith.constant 3.200000e+01 : f32
      %99 = vector.broadcast %cst_52 : f32 to vector<8x1xf32>
      %100 = arith.divf %98, %99 : vector<8x1xf32>
      %101 = vector.broadcast %100 : vector<8x1xf32> to vector<8x32xf32>
      %102 = arith.subf %92, %101 : vector<8x32xf32>
      %103 = arith.mulf %102, %102 : vector<8x32xf32>
      %cst_53 = arith.constant dense<0.000000e+00> : vector<8xf32>
      %104 = vector.multi_reduction <add>, %103, %cst_53 [1] : vector<8x32xf32> to vector<8xf32>
      %105 = vector.shape_cast %104 : vector<8xf32> to vector<8x1xf32>
      %cst_54 = arith.constant 3.200000e+01 : f32
      %106 = vector.broadcast %cst_54 : f32 to vector<8x1xf32>
      %107 = arith.divf %105, %106 : vector<8x1xf32>
      %108 = vector.broadcast %100 : vector<8x1xf32> to vector<8x32xf32>
      %109 = arith.subf %92, %108 : vector<8x32xf32>
      %cst_55 = arith.constant 9.99999974E-6 : f32
      %110 = vector.broadcast %cst_55 : f32 to vector<8x1xf32>
      %111 = arith.addf %107, %110 : vector<8x1xf32>
      %112 = math.rsqrt %111 : vector<8x1xf32>
      %113 = vector.broadcast %112 : vector<8x1xf32> to vector<8x32xf32>
      %114 = arith.mulf %109, %113 : vector<8x32xf32>
      %115 = vector.shape_cast %94 : vector<32xf32> to vector<1x32xf32>
      %116 = vector.broadcast %115 : vector<1x32xf32> to vector<8x32xf32>
      %117 = arith.mulf %114, %116 : vector<8x32xf32>
      %118 = vector.shape_cast %96 : vector<32xf32> to vector<1x32xf32>
      %119 = vector.broadcast %118 : vector<1x32xf32> to vector<8x32xf32>
      %120 = arith.addf %117, %119 : vector<8x32xf32>
      %c0_56 = arith.constant 0 : index
      %c0_57 = arith.constant 0 : index
      %c0_58 = arith.constant 0 : index
      %121 = vector.load %arg16[%c0_56, %c0_57, %c0_58] : memref<1x8x32xf32, #tpu.memory_space<vmem>>, vector<1x8x32xf32>
      %122 = vector.shape_cast %121 : vector<1x8x32xf32> to vector<8x32xf32>
      %123 = vector.shape_cast %120 : vector<8x32xf32> to vector<1x8x32xf32>
      tpu.vector_store %arg16[%c0_56, %c0_57, %c0_58], %123 {strides = array<i32>} : memref<1x8x32xf32, #tpu.memory_space<vmem>>, vector<1x8x32xf32>,
    } else {
    }
    return
  }
  func.func @transform_0(%arg0: i32, %arg1: i32, %arg2: i32) -> (i32, i32, i32) {
    %c0_i32 = arith.constant 0 : i32
    %c0_i32_0 = arith.constant 0 : i32
    return %arg0, %arg1, %c0_i32 : i32, i32, i32
  }
  func.func @transform_1(%arg0: i32, %arg1: i32, %arg2: i32) -> (i32, i32, i32) {
    %c0_i32 = arith.constant 0 : i32
    %c0_i32_0 = arith.constant 0 : i32
    return %arg0, %arg2, %c0_i32 : i32, i32, i32
  }
  func.func @transform_2(%arg0: i32, %arg1: i32, %arg2: i32) -> (i32, i32) {
    %c0_i32 = arith.constant 0 : i32
    %c0_i32_0 = arith.constant 0 : i32
    %c0_i32_1 = arith.constant 0 : i32
    return %c0_i32, %c0_i32_0 : i32, i32
  }
  func.func @transform_3(%arg0: i32, %arg1: i32, %arg2: i32) -> (i32, i32) {
    %c0_i32 = arith.constant 0 : i32
    %c0_i32_0 = arith.constant 0 : i32
    %c0_i32_1 = arith.constant 0 : i32
    return %c0_i32, %c0_i32_0 : i32, i32
  }
  func.func @transform_4(%arg0: i32, %arg1: i32, %arg2: i32) -> (i32, i32) {
    %c0_i32 = arith.constant 0 : i32
    %c0_i32_0 = arith.constant 0 : i32
    %c0_i32_1 = arith.constant 0 : i32
    return %c0_i32, %c0_i32_0 : i32, i32
  }
  func.func @transform_5(%arg0: i32, %arg1: i32, %arg2: i32) -> (i32, i32) {
    %c0_i32 = arith.constant 0 : i32
    %c0_i32_0 = arith.constant 0 : i32
    %c0_i32_1 = arith.constant 0 : i32
    return %c0_i32, %c0_i32_0 : i32, i32
  }
  func.func @transform_6(%arg0: i32, %arg1: i32, %arg2: i32) -> (i32, i32) {
    %c0_i32 = arith.constant 0 : i32
    %c0_i32_0 = arith.constant 0 : i32
    %c0_i32_1 = arith.constant 0 : i32
    return %c0_i32, %c0_i32_0 : i32, i32
  }
  func.func @transform_7(%arg0: i32, %arg1: i32, %arg2: i32) -> (i32, i32) {
    %c0_i32 = arith.constant 0 : i32
    %c0_i32_0 = arith.constant 0 : i32
    %c0_i32_1 = arith.constant 0 : i32
    return %c0_i32, %c0_i32_0 : i32, i32
  }
  func.func @transform_8(%arg0: i32, %arg1: i32, %arg2: i32) -> (i32, i32) {
    %c0_i32 = arith.constant 0 : i32
    %c0_i32_0 = arith.constant 0 : i32
    %c0_i32_1 = arith.constant 0 : i32
    return %c0_i32, %c0_i32_0 : i32, i32
  }
  func.func @transform_9(%arg0: i32, %arg1: i32, %arg2: i32) -> (i32, i32) {
    %c0_i32 = arith.constant 0 : i32
    %c0_i32_0 = arith.constant 0 : i32
    %c0_i32_1 = arith.constant 0 : i32
    return %c0_i32, %c0_i32_0 : i32, i32
  }
  func.func @transform_10(%arg0: i32, %arg1: i32, %arg2: i32) -> (i32, i32) {
    %c0_i32 = arith.constant 0 : i32
    %c0_i32_0 = arith.constant 0 : i32
    %c0_i32_1 = arith.constant 0 : i32
    return %c0_i32, %c0_i32_0 : i32, i32
  }
  func.func @transform_11(%arg0: i32, %arg1: i32, %arg2: i32) -> (i32, i32) {
    %c0_i32 = arith.constant 0 : i32
    %c0_i32_0 = arith.constant 0 : i32
    %c0_i32_1 = arith.constant 0 : i32
    return %c0_i32, %c0_i32_0 : i32, i32
  }
  func.func @transform_12(%arg0: i32, %arg1: i32, %arg2: i32) -> (i32, i32) {
    %c0_i32 = arith.constant 0 : i32
    %c0_i32_0 = arith.constant 0 : i32
    %c0_i32_1 = arith.constant 0 : i32
    return %c0_i32, %c0_i32_0 : i32, i32
  }
  func.func @transform_13(%arg0: i32, %arg1: i32, %arg2: i32) -> (i32, i32, i32) {
    %c0_i32 = arith.constant 0 : i32
    %c0_i32_0 = arith.constant 0 : i32
    return %arg0, %arg1, %c0_i32 : i32, i32, i32
  }
}

</mosaic_0001>

<llo_original>
// kernel: tpu_custom_call.1
$region0: #{tpu_custom_call.1}
  #allocation0 [shape = 'u32[]', space=smem, size = 0x4, offset = 0x4, fixed_abs, tag = 'smem constant byte address 0x4 - core index']
  #allocation1 [shape = 'u32[144,128]{1,0:T(1,128)}', space=vmem, size = 0x12000, scoped, tag = 'internal scratch']
  #allocation2 [shape = 'f32[8,32]{1,0:T(8,128)}', space=vmem, size = 0x1000, scoped, tag = 'scratch operand']
  #allocation3 [shape = 'f32[2,8,1]{2,1,0:T(8,128)}', space=vmem, size = 0x2000, scoped, tag = 'scratch operand']
  #allocation4 [shape = 'f32[2,8,1]{2,1,0:T(8,128)}', space=vmem, size = 0x2000, scoped, tag = 'scratch operand']
  #allocation5 [shape = 'f32[8,32]{1,0:T(8,128)}', space=vmem, size = 0x1000, scoped, tag = 'scratch operand']
  %s0 = inlined_call_operand.vmem [shape: f32[2,8,32], index: 0, kind: input, shape index: {}]
  %s1 = inlined_call_operand.vmem [shape: f32[2,8,32], index: 1, kind: input, shape index: {}]
  %s2 = inlined_call_operand.vmem [shape: bf16[32,32], index: 2, kind: input, shape index: {}]
  %s3 = inlined_call_operand.vmem [shape: bf16[64,32], index: 3, kind: input, shape index: {}]
  %s4 = inlined_call_operand.vmem [shape: bf16[32,32], index: 4, kind: input, shape index: {}]
  %s5 = inlined_call_operand.vmem [shape: bf16[64,32], index: 5, kind: input, shape index: {}]
  %s6 = inlined_call_operand.vmem [shape: f32[1,64], index: 6, kind: input, shape index: {}]
  %s7 = inlined_call_operand.vmem [shape: bf16[32,64], index: 7, kind: input, shape index: {}]
  %s8 = inlined_call_operand.vmem [shape: f32[1,32], index: 8, kind: input, shape index: {}]
  %s9 = inlined_call_operand.vmem [shape: f32[1,32], index: 9, kind: input, shape index: {}]
  %s10 = inlined_call_operand.vmem [shape: f32[1,32], index: 10, kind: input, shape index: {}]
  %s11 = inlined_call_operand.vmem [shape: f32[1,32], index: 11, kind: input, shape index: {}]
  %s12 = inlined_call_operand.vmem [shape: f32[1,32], index: 12, kind: input, shape index: {}]
  %s13 = inlined_call_operand.hbm [shape: f32[2,8,32], index: 13, kind: output, shape index: {}]
  %s14 = sld [smem:[#allocation0]]
  $region97: #{tpu_custom_call.1} parent=0
    _
  %s16 = ssub.s32 1, %s14
  %s17 = scalar_select 0, %s16, %s14
  $region1: #{tpu_custom_call.1} parent=0
    #allocation6 [shape = 'u8[8192]{0}', space=vmem, size = 0x2000, scoped, tag = 'output window, operand 0']
    #allocation7 [shape = 's32[2]{0}', space=sflag, size = 0x8, scoped, tag = 'scoped memory for tpu_custom_call.1']
    %18 = vsyncpa [#allocation7], 0
    %s19 = scalar_lea.sflag [#allocation7], 1
    %20 = vsyncpa %s19, 0
    loop: start=0, step=1, limit=4
    $region2: #{tpu_custom_call.1} parent=1 // loop_pre_header
      _
    $region3: #{tpu_custom_call.1} parent=1 // loop_header
      %s22 = sphi 0, %s26
      %p23 = scmp.ge.s32.totalorder %s22, 4
      %s29 = sphi 0, %s48
      %s30 = sphi 0, %s44
      %s31 = sphi 0, %s40
      %s32 = sphi 0, %s29
      %s33 = sphi 0, %s30
      %s34 = sphi 0, %s31
      %s35 = sphi 0, %s32
      %s36 = sphi 0, %s33
      %s37 = sphi 0, %s34
      %s53 = sphi 0, %s55
      %s56 = sphi 0, %s53
      %s57 = sphi 0, %s56
      %s73 = sphi 0, %s57
      %s81 = sphi 0, %s83
      %s84 = sphi 0, %s81
      %s85 = sphi 0, %s84
      %s101 = sphi 0, %s85
      %s105 = sphi 0, %s105
      %s107 = sphi 0, %s105
      %s108 = sphi 0, %s107
      %s122 = sphi 0, %s108
      %s126 = sphi 0, %s126
      %s128 = sphi 0, %s126
      %s129 = sphi 0, %s128
      %s143 = sphi 0, %s129
      %s147 = sphi 0, %s147
      %s149 = sphi 0, %s147
      %s150 = sphi 0, %s149
      %s164 = sphi 0, %s150
      %s168 = sphi 0, %s168
      %s170 = sphi 0, %s168
      %s171 = sphi 0, %s170
      %s185 = sphi 0, %s171
      %s189 = sphi 0, %s189
      %s191 = sphi 0, %s189
      %s192 = sphi 0, %s191
      %s206 = sphi 0, %s192
      %s210 = sphi 0, %s210
      %s212 = sphi 0, %s210
      %s213 = sphi 0, %s212
      %s227 = sphi 0, %s213
      %s231 = sphi 0, %s231
      %s233 = sphi 0, %s231
      %s234 = sphi 0, %s233
      %s248 = sphi 0, %s234
      %s252 = sphi 0, %s252
      %s254 = sphi 0, %s252
      %s255 = sphi 0, %s254
      %s269 = sphi 0, %s255
      %s273 = sphi 0, %s273
      %s275 = sphi 0, %s273
      %s276 = sphi 0, %s275
      %s290 = sphi 0, %s276
      %s294 = sphi 0, %s294
      %s296 = sphi 0, %s294
      %s297 = sphi 0, %s296
      %s311 = sphi 0, %s297
      %s315 = sphi 0, %s315
      %s317 = sphi 0, %s315
      %s318 = sphi 0, %s317
      %s332 = sphi 0, %s318
      %s340 = sphi 0, %s342
      %s343 = sphi 0, %s340
      %s344 = sphi 0, %s343
      %s360 = sphi 0, %s344
    $region4: #{tpu_custom_call.1} parent=1 // loop_header_branch
      %25 = sbr.rel (%p23) target = $region8
    $region5: #{tpu_custom_call.1} parent=1 // loop_body
      %s27 = ssub.s32 %s22, 1
      %s28 = ssub.s32 %s22, 2
      %s38 = sadd.s32 1, %s31
      %p39 = scmp.ge.s32.totalorder %s38, 1
      %s40 = scalar_select %p39, 0, %s38
      %s41 = sadd.s32 1, %s30
      %s42 = scalar_select %p39, %s41, %s30
      %p43 = scmp.ge.s32.totalorder %s42, 1
      %s44 = scalar_select %p43, 0, %s42
      %s45 = sadd.s32 1, %s29
      %s46 = scalar_select %p43, %s45, %s29
      %p47 = scmp.ge.s32.totalorder %s46, 2
      %s48 = scalar_select %p47, 0, %s46
      %s49 = ssub.s32 %s29, %s48
      %s50 = ssub.s32 %s30, %s44
      %s51 = sor.u32 %s49, %s50
      %p52 = scmp.eq.s32.totalorder %s51, 0
      %s54 = sadd.s32 %s53, 1
      %s55 = scalar_select %p52, %s53, %s54
      %p58 = pneg %p52
      %p59 = scmp.eq.s32.totalorder %s22, 1
      %p60 = por %p58, %p59
      %p61 = scmp.ne.s32.totalorder %s53, %s56
      %p62 = scmp.eq.s32.totalorder %s22, 0
      %p63 = por %p61, %p62
      %p64 = scmp.ne.s32.totalorder %s53, %s56
      %p65 = scmp.eq.s32.totalorder %s27, 1
      %p66 = por %p64, %p65
      %p67 = scmp.ne.s32.totalorder %s56, %s57
      %p68 = scmp.eq.s32.totalorder %s27, 0
      %p69 = por %p67, %p68
      %p70 = scmp.ne.s32.totalorder %s56, %s57
      %p71 = scmp.eq.s32.totalorder %s28, 1
      %p72 = por %p70, %p71
      %p74 = scmp.ne.s32.totalorder %s57, %s73
      %p75 = scmp.eq.s32.totalorder %s28, 0
      %p76 = por %p74, %p75
      %s77 = ssub.s32 %s29, %s48
      %s78 = ssub.s32 %s31, %s40
      %s79 = sor.u32 %s77, %s78
      %p80 = scmp.eq.s32.totalorder %s79, 0
      %s82 = sadd.s32 %s81, 1
      %s83 = scalar_select %p80, %s81, %s82
      %p86 = pneg %p80
      %p87 = scmp.eq.s32.totalorder %s22, 1
      %p88 = por %p86, %p87
      %p89 = scmp.ne.s32.totalorder %s81, %s84
      %p90 = scmp.eq.s32.totalorder %s22, 0
      %p91 = por %p89, %p90
      %p92 = scmp.ne.s32.totalorder %s81, %s84
      %p93 = scmp.eq.s32.totalorder %s27, 1
      %p94 = por %p92, %p93
      %p95 = scmp.ne.s32.totalorder %s84, %s85
      %p96 = scmp.eq.s32.totalorder %s27, 0
      %p97 = por %p95, %p96
      %p98 = scmp.ne.s32.totalorder %s84, %s85
      %p99 = scmp.eq.s32.totalorder %s28, 1
      %p100 = por %p98, %p99
      %p102 = scmp.ne.s32.totalorder %s85, %s101
      %p103 = scmp.eq.s32.totalorder %s28, 0
      %p104 = por %p102, %p103
      %s106 = sadd.s32 %s105, 1
      %p109 = scmp.eq.s32.totalorder %s22, 1
      %p110 = scmp.ne.s32.totalorder %s105, %s107
      %p111 = scmp.eq.s32.totalorder %s22, 0
      %p112 = por %p110, %p111
      %p113 = scmp.ne.s32.totalorder %s105, %s107
      %p114 = scmp.eq.s32.totalorder %s27, 1
      %p115 = por %p113, %p114
      %p116 = scmp.ne.s32.totalorder %s107, %s108
      %p117 = scmp.eq.s32.totalorder %s27, 0
      %p118 = por %p116, %p117
      %p119 = scmp.ne.s32.totalorder %s107, %s108
      %p120 = scmp.eq.s32.totalorder %s28, 1
      %p121 = por %p119, %p120
      %p123 = scmp.ne.s32.totalorder %s108, %s122
      %p124 = scmp.eq.s32.totalorder %s28, 0
      %p125 = por %p123, %p124
      %s127 = sadd.s32 %s126, 1
      %p130 = scmp.eq.s32.totalorder %s22, 1
      %p131 = scmp.ne.s32.totalorder %s126, %s128
      %p132 = scmp.eq.s32.totalorder %s22, 0
      %p133 = por %p131, %p132
      %p134 = scmp.ne.s32.totalorder %s126, %s128
      %p135 = scmp.eq.s32.totalorder %s27, 1
      %p136 = por %p134, %p135
      %p137 = scmp.ne.s32.totalorder %s128, %s129
      %p138 = scmp.eq.s32.totalorder %s27, 0
      %p139 = por %p137, %p138
      %p140 = scmp.ne.s32.totalorder %s128, %s129
      %p141 = scmp.eq.s32.totalorder %s28, 1
      %p142 = por %p140, %p141
      %p144 = scmp.ne.s32.totalorder %s129, %s143
      %p145 = scmp.eq.s32.totalorder %s28, 0
      %p146 = por %p144, %p145
      %s148 = sadd.s32 %s147, 1
      %p151 = scmp.eq.s32.totalorder %s22, 1
      %p152 = scmp.ne.s32.totalorder %s147, %s149
      %p153 = scmp.eq.s32.totalorder %s22, 0
      %p154 = por %p152, %p153
      %p155 = scmp.ne.s32.totalorder %s147, %s149
      %p156 = scmp.eq.s32.totalorder %s27, 1
      %p157 = por %p155, %p156
      %p158 = scmp.ne.s32.totalorder %s149, %s150
      %p159 = scmp.eq.s32.totalorder %s27, 0
      %p160 = por %p158, %p159
      %p161 = scmp.ne.s32.totalorder %s149, %s150
      %p162 = scmp.eq.s32.totalorder %s28, 1
      %p163 = por %p161, %p162
      %p165 = scmp.ne.s32.totalorder %s150, %s164
      %p166 = scmp.eq.s32.totalorder %s28, 0
      %p167 = por %p165, %p166
      %s169 = sadd.s32 %s168, 1
      %p172 = scmp.eq.s32.totalorder %s22, 1
      %p173 = scmp.ne.s32.totalorder %s168, %s170
      %p174 = scmp.eq.s32.totalorder %s22, 0
      %p175 = por %p173, %p174
      %p176 = scmp.ne.s32.totalorder %s168, %s170
      %p177 = scmp.eq.s32.totalorder %s27, 1
      %p178 = por %p176, %p177
      %p179 = scmp.ne.s32.totalorder %s170, %s171
      %p180 = scmp.eq.s32.totalorder %s27, 0
      %p181 = por %p179, %p180
      %p182 = scmp.ne.s32.totalorder %s170, %s171
      %p183 = scmp.eq.s32.totalorder %s28, 1
      %p184 = por %p182, %p183
      %p186 = scmp.ne.s32.totalorder %s171, %s185
      %p187 = scmp.eq.s32.totalorder %s28, 0
      %p188 = por %p186, %p187
      %s190 = sadd.s32 %s189, 1
      %p193 = scmp.eq.s32.totalorder %s22, 1
      %p194 = scmp.ne.s32.totalorder %s189, %s191
      %p195 = scmp.eq.s32.totalorder %s22, 0
      %p196 = por %p194, %p195
      %p197 = scmp.ne.s32.totalorder %s189, %s191
      %p198 = scmp.eq.s32.totalorder %s27, 1
      %p199 = por %p197, %p198
      %p200 = scmp.ne.s32.totalorder %s191, %s192
      %p201 = scmp.eq.s32.totalorder %s27, 0
      %p202 = por %p200, %p201
      %p203 = scmp.ne.s32.totalorder %s191, %s192
      %p204 = scmp.eq.s32.totalorder %s28, 1
      %p205 = por %p203, %p204
      %p207 = scmp.ne.s32.totalorder %s192, %s206
      %p208 = scmp.eq.s32.totalorder %s28, 0
      %p209 = por %p207, %p208
      %s211 = sadd.s32 %s210, 1
      %p214 = scmp.eq.s32.totalorder %s22, 1
      %p215 = scmp.ne.s32.totalorder %s210, %s212
      %p216 = scmp.eq.s32.totalorder %s22, 0
      %p217 = por %p215, %p216
      %p218 = scmp.ne.s32.totalorder %s210, %s212
      %p219 = scmp.eq.s32.totalorder %s27, 1
      %p220 = por %p218, %p219
      %p221 = scmp.ne.s32.totalorder %s212, %s213
      %p222 = scmp.eq.s32.totalorder %s27, 0
      %p223 = por %p221, %p222
      %p224 = scmp.ne.s32.totalorder %s212, %s213
      %p225 = scmp.eq.s32.totalorder %s28, 1
      %p226 = por %p224, %p225
      %p228 = scmp.ne.s32.totalorder %s213, %s227
      %p229 = scmp.eq.s32.totalorder %s28, 0
      %p230 = por %p228, %p229
      %s232 = sadd.s32 %s231, 1
      %p235 = scmp.eq.s32.totalorder %s22, 1
      %p236 = scmp.ne.s32.totalorder %s231, %s233
      %p237 = scmp.eq.s32.totalorder %s22, 0
      %p238 = por %p236, %p237
      %p239 = scmp.ne.s32.totalorder %s231, %s233
      %p240 = scmp.eq.s32.totalorder %s27, 1
      %p241 = por %p239, %p240
      %p242 = scmp.ne.s32.totalorder %s233, %s234
      %p243 = scmp.eq.s32.totalorder %s27, 0
      %p244 = por %p242, %p243
      %p245 = scmp.ne.s32.totalorder %s233, %s234
      %p246 = scmp.eq.s32.totalorder %s28, 1
      %p247 = por %p245, %p246
      %p249 = scmp.ne.s32.totalorder %s234, %s248
      %p250 = scmp.eq.s32.totalorder %s28, 0
      %p251 = por %p249, %p250
      %s253 = sadd.s32 %s252, 1
      %p256 = scmp.eq.s32.totalorder %s22, 1
      %p257 = scmp.ne.s32.totalorder %s252, %s254
      %p258 = scmp.eq.s32.totalorder %s22, 0
      %p259 = por %p257, %p258
      %p260 = scmp.ne.s32.totalorder %s252, %s254
      %p261 = scmp.eq.s32.totalorder %s27, 1
      %p262 = por %p260, %p261
      %p263 = scmp.ne.s32.totalorder %s254, %s255
      %p264 = scmp.eq.s32.totalorder %s27, 0
      %p265 = por %p263, %p264
      %p266 = scmp.ne.s32.totalorder %s254, %s255
      %p267 = scmp.eq.s32.totalorder %s28, 1
      %p268 = por %p266, %p267
      %p270 = scmp.ne.s32.totalorder %s255, %s269
      %p271 = scmp.eq.s32.totalorder %s28, 0
      %p272 = por %p270, %p271
      %s274 = sadd.s32 %s273, 1
      %p277 = scmp.eq.s32.totalorder %s22, 1
      %p278 = scmp.ne.s32.totalorder %s273, %s275
      %p279 = scmp.eq.s32.totalorder %s22, 0
      %p280 = por %p278, %p279
      %p281 = scmp.ne.s32.totalorder %s273, %s275
      %p282 = scmp.eq.s32.totalorder %s27, 1
      %p283 = por %p281, %p282
      %p284 = scmp.ne.s32.totalorder %s275, %s276
      %p285 = scmp.eq.s32.totalorder %s27, 0
      %p286 = por %p284, %p285
      %p287 = scmp.ne.s32.totalorder %s275, %s276
      %p288 = scmp.eq.s32.totalorder %s28, 1
      %p289 = por %p287, %p288
      %p291 = scmp.ne.s32.totalorder %s276, %s290
      %p292 = scmp.eq.s32.totalorder %s28, 0
      %p293 = por %p291, %p292
      %s295 = sadd.s32 %s294, 1
      %p298 = scmp.eq.s32.totalorder %s22, 1
      %p299 = scmp.ne.s32.totalorder %s294, %s296
      %p300 = scmp.eq.s32.totalorder %s22, 0
      %p301 = por %p299, %p300
      %p302 = scmp.ne.s32.totalorder %s294, %s296
      %p303 = scmp.eq.s32.totalorder %s27, 1
      %p304 = por %p302, %p303
      %p305 = scmp.ne.s32.totalorder %s296, %s297
      %p306 = scmp.eq.s32.totalorder %s27, 0
      %p307 = por %p305, %p306
      %p308 = scmp.ne.s32.totalorder %s296, %s297
      %p309 = scmp.eq.s32.totalorder %s28, 1
      %p310 = por %p308, %p309
      %p312 = scmp.ne.s32.totalorder %s297, %s311
      %p313 = scmp.eq.s32.totalorder %s28, 0
      %p314 = por %p312, %p313
      %s316 = sadd.s32 %s315, 1
      %p319 = scmp.eq.s32.totalorder %s22, 1
      %p320 = scmp.ne.s32.totalorder %s315, %s317
      %p321 = scmp.eq.s32.totalorder %s22, 0
      %p322 = por %p320, %p321
      %p323 = scmp.ne.s32.totalorder %s315, %s317
      %p324 = scmp.eq.s32.totalorder %s27, 1
      %p325 = por %p323, %p324
      %p326 = scmp.ne.s32.totalorder %s317, %s318
      %p327 = scmp.eq.s32.totalorder %s27, 0
      %p328 = por %p326, %p327
      %p329 = scmp.ne.s32.totalorder %s317, %s318
      %p330 = scmp.eq.s32.totalorder %s28, 1
      %p331 = por %p329, %p330
      %p333 = scmp.ne.s32.totalorder %s318, %s332
      %p334 = scmp.eq.s32.totalorder %s28, 0
      %p335 = por %p333, %p334
      %s336 = ssub.s32 %s29, %s48
      %s337 = ssub.s32 %s30, %s44
      %s338 = sor.u32 %s336, %s337
      %p339 = scmp.eq.s32.totalorder %s338, 0
      %s341 = sadd.s32 %s340, 1
      %s342 = scalar_select %p339, %s340, %s341
      %p345 = pneg %p339
      %p346 = scmp.eq.s32.totalorder %s22, 1
      %p347 = por %p345, %p346
      %p348 = scmp.ne.s32.totalorder %s340, %s343
      %p349 = scmp.eq.s32.totalorder %s22, 0
      %p350 = por %p348, %p349
      %p351 = scmp.ne.s32.totalorder %s340, %s343
      %p352 = scmp.eq.s32.totalorder %s27, 1
      %p353 = por %p351, %p352
      %p354 = scmp.ne.s32.totalorder %s343, %s344
      %p355 = scmp.eq.s32.totalorder %s27, 0
      %p356 = por %p354, %p355
      %p357 = scmp.ne.s32.totalorder %s343, %s344
      %p358 = scmp.eq.s32.totalorder %s28, 1
      %p359 = por %p357, %p358
      %p361 = scmp.ne.s32.totalorder %s344, %s360
      %p362 = scmp.eq.s32.totalorder %s28, 0
      %p363 = por %p361, %p362
      %p364 = scmp.le.s32.totalorder 1, %s22
      %p365 = scmp.lt.s32.totalorder %s22, 3
      %p366 = pnand %p364, %p365
      %p367 = pneg %p366
      // Predicated region
      $region9: #{tpu_custom_call.1} parent=5 // pred_check
        _
      $region10: #{tpu_custom_call.1} parent=5 // pred_check_branch
        %369 = sbr.rel (%p366) target = $region12
      $region11: #{tpu_custom_call.1} parent=5 // pred_region
        %s370 = ssub.s32 %s22, 1
        // Predicated region
        $region13: #{tpu_custom_call.1} parent=11 // pred_check
          %p371 = pneg %p118
        $region14: #{tpu_custom_call.1} parent=11 // pred_check_branch
          %373 = sbr.rel (%p371) target = $region16
        $region15: #{tpu_custom_call.1} parent=11 // pred_region
          _
        $region16: #{tpu_custom_call.1} parent=11 // pred_fallthru
          _
        // Predicated region
        $region17: #{tpu_custom_call.1} parent=11 // pred_check
          %p374 = pneg %p139
        $region18: #{tpu_custom_call.1} parent=11 // pred_check_branch
          %376 = sbr.rel (%p374) target = $region20
        $region19: #{tpu_custom_call.1} parent=11 // pred_region
          _
        $region20: #{tpu_custom_call.1} parent=11 // pred_fallthru
          _
        // Predicated region
        $region21: #{tpu_custom_call.1} parent=11 // pred_check
          %p377 = pneg %p160
        $region22: #{tpu_custom_call.1} parent=11 // pred_check_branch
          %379 = sbr.rel (%p377) target = $region24
        $region23: #{tpu_custom_call.1} parent=11 // pred_region
          _
        $region24: #{tpu_custom_call.1} parent=11 // pred_fallthru
          _
        // Predicated region
        $region25: #{tpu_custom_call.1} parent=11 // pred_check
          %p380 = pneg %p181
        $region26: #{tpu_custom_call.1} parent=11 // pred_check_branch
          %382 = sbr.rel (%p380) target = $region28
        $region27: #{tpu_custom_call.1} parent=11 // pred_region
          _
        $region28: #{tpu_custom_call.1} parent=11 // pred_fallthru
          _
        // Predicated region
        $region29: #{tpu_custom_call.1} parent=11 // pred_check
          %p383 = pneg %p202
        $region30: #{tpu_custom_call.1} parent=11 // pred_check_branch
          %385 = sbr.rel (%p383) target = $region32
        $region31: #{tpu_custom_call.1} parent=11 // pred_region
          _
        $region32: #{tpu_custom_call.1} parent=11 // pred_fallthru
          _
        // Predicated region
        $region33: #{tpu_custom_call.1} parent=11 // pred_check
          %p386 = pneg %p223
        $region34: #{tpu_custom_call.1} parent=11 // pred_check_branch
          %388 = sbr.rel (%p386) target = $region36
        $region35: #{tpu_custom_call.1} parent=11 // pred_region
          _
        $region36: #{tpu_custom_call.1} parent=11 // pred_fallthru
          _
        // Predicated region
        $region37: #{tpu_custom_call.1} parent=11 // pred_check
          %p389 = pneg %p244
        $region38: #{tpu_custom_call.1} parent=11 // pred_check_branch
          %391 = sbr.rel (%p389) target = $region40
        $region39: #{tpu_custom_call.1} parent=11 // pred_region
          _
        $region40: #{tpu_custom_call.1} parent=11 // pred_fallthru
          _
        // Predicated region
        $region41: #{tpu_custom_call.1} parent=11 // pred_check
          %p392 = pneg %p265
        $region42: #{tpu_custom_call.1} parent=11 // pred_check_branch
          %394 = sbr.rel (%p392) target = $region44
        $region43: #{tpu_custom_call.1} parent=11 // pred_region
          _
        $region44: #{tpu_custom_call.1} parent=11 // pred_fallthru
          _
        // Predicated region
        $region45: #{tpu_custom_call.1} parent=11 // pred_check
          %p395 = pneg %p286
        $region46: #{tpu_custom_call.1} parent=11 // pred_check_branch
          %397 = sbr.rel (%p395) target = $region48
        $region47: #{tpu_custom_call.1} parent=11 // pred_region
          _
        $region48: #{tpu_custom_call.1} parent=11 // pred_fallthru
          _
        // Predicated region
        $region49: #{tpu_custom_call.1} parent=11 // pred_check
          %p398 = pneg %p307
        $region50: #{tpu_custom_call.1} parent=11 // pred_check_branch
          %400 = sbr.rel (%p398) target = $region52
        $region51: #{tpu_custom_call.1} parent=11 // pred_region
          _
        $region52: #{tpu_custom_call.1} parent=11 // pred_fallthru
          _
        // Predicated region
        $region53: #{tpu_custom_call.1} parent=11 // pred_check
          %p401 = pneg %p328
        $region54: #{tpu_custom_call.1} parent=11 // pred_check_branch
          %403 = sbr.rel (%p401) target = $region56
        $region55: #{tpu_custom_call.1} parent=11 // pred_region
          _
        $region56: #{tpu_custom_call.1} parent=11 // pred_fallthru
          _
      $region12: #{tpu_custom_call.1} parent=5 // pred_fallthru
        _
      %p404 = scmp.lt.s32.totalorder %s22, 2
      // Predicated region
      $region57: #{tpu_custom_call.1} parent=5 // pred_check
        %p405 = pneg %p404
      $region58: #{tpu_custom_call.1} parent=5 // pred_check_branch
        %407 = sbr.rel (%p405) target = $region60
      $region59: #{tpu_custom_call.1} parent=5 // pred_region
        // Predicated region
        $region61: #{tpu_custom_call.1} parent=59 // pred_check
          %p408 = pneg %p63
        $region62: #{tpu_custom_call.1} parent=59 // pred_check_branch
          %410 = sbr.rel (%p408) target = $region64
        $region63: #{tpu_custom_call.1} parent=59 // pred_region
          %p411 = scmp.lt.s32.totalorder %s29, 1
          %s412 = scalar_select %p411, %s29, 1
          %p413 = scmp.lt.s32.totalorder %s30, 0
          %s414 = scalar_select %p413, %s30, 0
          %s415 = sadd.s32 %s414, %s412
          %s416 = smul.addr %s415, 8
          %s417 = scalar_lea.vmem %s0, %s416
        $region64: #{tpu_custom_call.1} parent=59 // pred_fallthru
          _
        // Predicated region
        $region65: #{tpu_custom_call.1} parent=59 // pred_check
          %p418 = pneg %p91
        $region66: #{tpu_custom_call.1} parent=59 // pred_check_branch
          %420 = sbr.rel (%p418) target = $region68
        $region67: #{tpu_custom_call.1} parent=59 // pred_region
          %p421 = scmp.lt.s32.totalorder %s29, 1
          %s422 = scalar_select %p421, %s29, 1
          %p423 = scmp.lt.s32.totalorder %s31, 0
          %s424 = scalar_select %p423, %s31, 0
          %s425 = sadd.s32 %s424, %s422
          %s426 = smul.addr %s425, 8
          %s427 = scalar_lea.vmem %s1, %s426
        $region68: #{tpu_custom_call.1} parent=59 // pred_fallthru
          _
      $region60: #{tpu_custom_call.1} parent=5 // pred_fallthru
        _
      %p428 = scmp.le.s32.totalorder 1, %s22
      %p429 = scmp.lt.s32.totalorder %s22, 3
      %p430 = pnand %p428, %p429
      %p431 = pneg %p430
      // Predicated region
      $region69: #{tpu_custom_call.1} parent=5 // pred_check
        _
      $region70: #{tpu_custom_call.1} parent=5 // pred_check_branch
        %433 = sbr.rel (%p430) target = $region72
      $region71: #{tpu_custom_call.1} parent=5 // pred_region
        %s434 = ssub.s32 %s22, 1
        %p435 = scmp.lt.s32.totalorder %s32, 1
        %s436 = scalar_select %p435, %s32, 1
        %p437 = scmp.lt.s32.totalorder %s33, 0
        %s438 = scalar_select %p437, %s33, 0
        %s439 = sadd.s32 %s438, %s436
        %s440 = smul.addr %s439, 8
        %s441 = scalar_lea.vmem %s0, %s440
        %p442 = pneg %p69
        %p443 = pneg %p66
        %p444 = scmp.lt.s32.totalorder %s32, 1
        %s445 = scalar_select %p444, %s32, 1
        %p446 = scmp.lt.s32.totalorder %s34, 0
        %s447 = scalar_select %p446, %s34, 0
        %s448 = sadd.s32 %s447, %s445
        %s449 = smul.addr %s448, 8
        %s450 = scalar_lea.vmem %s1, %s449
        %p451 = pneg %p97
        %p452 = pneg %p94
        %p453 = pneg %p118
        %p454 = pneg %p115
        %p455 = pneg %p139
        %p456 = pneg %p136
        %p457 = pneg %p160
        %p458 = pneg %p157
        %p459 = pneg %p181
        %p460 = pneg %p178
        %p461 = pneg %p202
        %p462 = pneg %p199
        %p463 = pneg %p223
        %p464 = pneg %p220
        %p465 = pneg %p244
        %p466 = pneg %p241
        %p467 = pneg %p265
        %p468 = pneg %p262
        %p469 = pneg %p286
        %p470 = pneg %p283
        %p471 = pneg %p307
        %p472 = pneg %p304
        %p473 = pneg %p328
        %p474 = pneg %p325
        %p475 = pneg %p356
        %p476 = pneg %p353
        %s477 = sand.u32 %s343, 1
        %s478 = scalar_lea.sflag [#allocation7], %s477
        %s479 = sand.u32 %s343, 1
        %s480 = smul.addr %s479, 8
        %s481 = scalar_lea.vmem [#allocation6], %s480
        %p482 = scmp.lt.s32.totalorder %s32, 1
        %s483 = scalar_select %p482, %s32, 1
        %p484 = scmp.lt.s32.totalorder %s33, 0
        %s485 = scalar_select %p484, %s33, 0
        %s486 = sadd.s32 %s485, %s483
        %s487 = smul.addr %s486, 8
        %s488 = scalar_lea.vmem %s0, %s487
        %p489 = scmp.lt.s32.totalorder %s32, 1
        %s490 = scalar_select %p489, %s32, 1
        %p491 = scmp.lt.s32.totalorder %s34, 0
        %s492 = scalar_select %p491, %s34, 0
        %s493 = sadd.s32 %s492, %s490
        %s494 = smul.addr %s493, 8
        %s495 = scalar_lea.vmem %s1, %s494
        %p497 = scmp.eq.s32.totalorder %s34, 0
        // Predicated region
        $region73: #{tpu_custom_call.1} parent=71 // pred_check
          %p498 = pneg %p497
        $region74: #{tpu_custom_call.1} parent=71 // pred_check_branch
          %500 = sbr.rel (%p498) target = $region76
        $region75: #{tpu_custom_call.1} parent=71 // pred_region
          %v501 = vld [vmem:[%s488] sm:$0xff]
          %v502 = vld [vmem:[%s2] sm:$0xf]
          %v503 = vld [vmem:[%s2 + $0x4] sm:$0xf]
          %v504 = vld [vmem:[%s2 + $0x8] sm:$0xf]
          %v505 = vld [vmem:[%s2 + $0xc] sm:$0xf]
          %v506 = vpack.c.bf16 %v501, %v501
          %v511 = vunpack.c.l.b16 %v502
          %v512 = vunpack.c.l.b16 %v503
          %v513 = vunpack.c.l.b16 %v504
          %v514 = vunpack.c.l.b16 %v505
          %v515 = vpack.c.b16 %v512, %v511
          %v516 = vpack.c.b16 %v514, %v513
          %vm517 = vcmask 261120
          %v519 = vsel %vm517, %v506, 0
          %v522 = vsel %vm517, %v515, 0
          %v525 = vsel %vm517, %v516, 0
          %527 = vmatprep.subr.bf16.mxu0 0
          %528 = vmatpush1.bf16.xpose.msra.mxu0 0
          %529 = vmatprep.subr.bf16.mxu0 0
          %530 = vmatpush1.bf16.xpose.msra.mxu0 0
          %531 = vmatprep.subr.bf16.mxu0 0
          %532 = vmatpush1.bf16.xpose.msra.mxu0 0
          %533 = vmatprep.subr.bf16.mxu0 0
          %534 = vmatpush1.bf16.xpose.msra.mxu0 0
          %535 = vmatprep.subr.bf16.mxu0 0
          %536 = vmatpush1.bf16.xpose.msra.mxu0 0
          %537 = vmatprep.subr.bf16.mxu0 0
          %538 = vmatpush1.bf16.xpose.msra.mxu0 0
          %539 = vmatprep.subr.bf16.mxu0 0
          %540 = vmatpush1.bf16.xpose.msra.mxu0 %v525
          %541 = vmatprep.subr.bf16.mxu0 0
          %542 = vmatpush1.bf16.xpose.msra.mxu0 %v522
          %543 = vmatprep.subr.bf16.mxu0 0
          %544 = vmatpush2.bf16.xpose.msra.mxu0 0
          %545 = vmatprep.subr.bf16.mxu0 0
          %546 = vmatpush2.bf16.xpose.msra.mxu0 0
          %547 = vmatprep.subr.bf16.mxu0 0
          %548 = vmatpush2.bf16.xpose.msra.mxu0 0
          %549 = vmatprep.subr.bf16.mxu0 0
          %550 = vmatpush2.bf16.xpose.msra.mxu0 0
          %551 = vmatprep.subr.bf16.mxu0 0
          %552 = vmatpush2.bf16.xpose.msra.mxu0 0
          %553 = vmatprep.subr.bf16.mxu0 0
          %554 = vmatpush2.bf16.xpose.msra.mxu0 0
          %555 = vmatprep.subr.bf16.mxu0 0
          %556 = vmatpush2.bf16.xpose.msra.mxu0 0
          %557 = vmatprep.subr.bf16.mxu0 0
          %558 = vmatpush2.bf16.xpose.msra.mxu0 0
          %559 = vmatprep.mubr.bf16.mxu0 0
          %560 = vmatmul.mubr.bf16.gmra.mxu0 %v519
          %v561 = vpop.f32.mrf.mxu0
          %v562 = vadd.f32 0.0, %v561
          %v563 = vpop.f32.mrf.mxu0
          %v564 = vpop.f32.mrf.mxu0
          %v565 = vpop.f32.mrf.mxu0
          %566 = vdwg.mxu0
          %v567 = vmul.f32 %v562, 0.25
          %568 = vst.msk [vmem:[#allocation2] sm:$0xff] %vm517, %v567
          %vm569 = vcmask 7168
          %570 = vst.msk [vmem:[#allocation3] sm:$0xff] %vm569, -inf
          %571 = vst.msk [vmem:[#allocation3 + $0x8] sm:$0xff] %vm569, -inf
          %572 = vst.msk [vmem:[#allocation4] sm:$0xff] %vm569, 0.0
          %573 = vst.msk [vmem:[#allocation4 + $0x8] sm:$0xff] %vm569, 0.0
          %574 = vst.msk [vmem:[#allocation5] sm:$0xff] %vm517, 0.0
        $region76: #{tpu_custom_call.1} parent=71 // pred_fallthru
          _
        %s575 = smul.u32 %s33, 8
        %s576 = sadd.s32 %s575, 7
        %s577 = smul.u32 %s34, 8
        %p578 = scmp.le.s32.totalorder %s577, %s576
        // Predicated region
        $region77: #{tpu_custom_call.1} parent=71 // pred_check
          %p579 = pneg %p578
        $region78: #{tpu_custom_call.1} parent=71 // pred_check_branch
          %581 = sbr.rel (%p579) target = $region80
        $region79: #{tpu_custom_call.1} parent=71 // pred_region
          %v582 = vld [vmem:[%s495] sm:$0xff]
          %v583 = vld [vmem:[%s3] sm:$0xf]
          %v584 = vld [vmem:[%s3 + $0x4] sm:$0xf]
          %v585 = vld [vmem:[%s3 + $0x8] sm:$0xf]
          %v586 = vld [vmem:[%s3 + $0xc] sm:$0xf]
          %v587 = vld [vmem:[%s3 + $0x10] sm:$0xf]
          %v588 = vld [vmem:[%s3 + $0x14] sm:$0xf]
          %v589 = vld [vmem:[%s3 + $0x18] sm:$0xf]
          %v590 = vld [vmem:[%s3 + $0x1c] sm:$0xf]
          %v591 = vpack.c.bf16 %v582, %v582
          %v600 = vunpack.c.l.b16 %v583
          %v601 = vunpack.c.l.b16 %v584
          %v602 = vunpack.c.l.b16 %v585
          %v603 = vunpack.c.l.b16 %v586
          %v604 = vunpack.c.l.b16 %v587
          %v605 = vunpack.c.l.b16 %v588
          %v606 = vunpack.c.l.b16 %v589
          %v607 = vunpack.c.l.b16 %v590
          %v608 = vpack.c.b16 %v601, %v600
          %v609 = vpack.c.b16 %v603, %v602
          %v610 = vpack.c.b16 %v605, %v604
          %v611 = vpack.c.b16 %v607, %v606
          %vm612 = vcmask 261120
          %v614 = vsel %vm612, %v591, 0
          %v617 = vsel %vm612, %v608, 0
          %v620 = vsel %vm612, %v609, 0
          %v623 = vsel %vm612, %v610, 0
          %v626 = vsel %vm612, %v611, 0
          %628 = vmatprep.subr.bf16.mxu0 0
          %629 = vmatpush1.bf16.xpose.msra.mxu0 0
          %630 = vmatprep.subr.bf16.mxu0 0
          %631 = vmatpush1.bf16.xpose.msra.mxu0 0
          %632 = vmatprep.subr.bf16.mxu0 0
          %633 = vmatpush1.bf16.xpose.msra.mxu0 0
          %634 = vmatprep.subr.bf16.mxu0 0
          %635 = vmatpush1.bf16.xpose.msra.mxu0 0
          %636 = vmatprep.subr.bf16.mxu0 0
          %637 = vmatpush1.bf16.xpose.msra.mxu0 %v626
          %638 = vmatprep.subr.bf16.mxu0 0
          %639 = vmatpush1.bf16.xpose.msra.mxu0 %v623
          %640 = vmatprep.subr.bf16.mxu0 0
          %641 = vmatpush1.bf16.xpose.msra.mxu0 %v620
          %642 = vmatprep.subr.bf16.mxu0 0
          %643 = vmatpush1.bf16.xpose.msra.mxu0 %v617
          %644 = vmatprep.subr.bf16.mxu0 0
          %645 = vmatpush2.bf16.xpose.msra.mxu0 0
          %646 = vmatprep.subr.bf16.mxu0 0
          %647 = vmatpush2.bf16.xpose.msra.mxu0 0
          %648 = vmatprep.subr.bf16.mxu0 0
          %649 = vmatpush2.bf16.xpose.msra.mxu0 0
          %650 = vmatprep.subr.bf16.mxu0 0
          %651 = vmatpush2.bf16.xpose.msra.mxu0 0
          %652 = vmatprep.subr.bf16.mxu0 0
          %653 = vmatpush2.bf16.xpose.msra.mxu0 0
          %654 = vmatprep.subr.bf16.mxu0 0
          %655 = vmatpush2.bf16.xpose.msra.mxu0 0
          %656 = vmatprep.subr.bf16.mxu0 0
          %657 = vmatpush2.bf16.xpose.msra.mxu0 0
          %658 = vmatprep.subr.bf16.mxu0 0
          %659 = vmatpush2.bf16.xpose.msra.mxu0 0
          %660 = vmatprep.mubr.bf16.mxu0 0
          %661 = vmatmul.mubr.bf16.gmra.mxu0 %v614
          %v662 = vpop.f32.mrf.mxu0
          %v663 = vadd.f32 0.0, %v662
          %v664 = vpop.f32.mrf.mxu0
          %v665 = vpop.f32.mrf.mxu0
          %v666 = vpop.f32.mrf.mxu0
          %667 = vdwg.mxu0
          %v668 = vlaneseq
          %v669 = vshrl.u32 %v668, 7
          %v670 = vstv %s575
          %v671 = vadd.s32 %v670, %v669
          %v672 = vlaneseq
          %v673 = vand.u32 %v672, 127
          %v674 = vstv %s577
          %v675 = vadd.s32 %v674, %v673
          %vm676 = vcmp.le.s32.totalorder %v675, %v671
          %v677 = vld [vmem:[#allocation2] sm:$0xff]
          %v678 = vpack.c.bf16 %v677, %v677
          %v679 = vpack.c.bf16 %v663, %v663
          %vm680 = vcmask 130048
          %v682 = vsel %vm680, %v678, 0
          %v685 = vsel %vm680, %v679, 0
          %687 = vmatprep.subr.bf16.mxu0 0
          %688 = vmatpush1.bf16.xpose.msra.mxu0 0
          %689 = vmatprep.subr.bf16.mxu0 0
          %690 = vmatpush1.bf16.xpose.msra.mxu0 0
          %691 = vmatprep.subr.bf16.mxu0 0
          %692 = vmatpush1.bf16.xpose.msra.mxu0 0
          %693 = vmatprep.subr.bf16.mxu0 0
          %694 = vmatpush1.bf16.xpose.msra.mxu0 0
          %695 = vmatprep.subr.bf16.mxu0 0
          %696 = vmatpush1.bf16.xpose.msra.mxu0 0
          %697 = vmatprep.subr.bf16.mxu0 0
          %698 = vmatpush1.bf16.xpose.msra.mxu0 0
          %699 = vmatprep.subr.bf16.mxu0 0
          %700 = vmatpush1.bf16.xpose.msra.mxu0 0
          %701 = vmatprep.subr.bf16.mxu0 0
          %702 = vmatpush1.bf16.xpose.msra.mxu0 %v685
          %703 = vmatprep.subr.bf16.mxu0 0
          %704 = vmatpush2.bf16.xpose.msra.mxu0 0
          %705 = vmatprep.subr.bf16.mxu0 0
          %706 = vmatpush2.bf16.xpose.msra.mxu0 0
          %707 = vmatprep.subr.bf16.mxu0 0
          %708 = vmatpush2.bf16.xpose.msra.mxu0 0
          %709 = vmatprep.subr.bf16.mxu0 0
          %710 = vmatpush2.bf16.xpose.msra.mxu0 0
          %711 = vmatprep.subr.bf16.mxu0 0
          %712 = vmatpush2.bf16.xpose.msra.mxu0 0
          %713 = vmatprep.subr.bf16.mxu0 0
          %714 = vmatpush2.bf16.xpose.msra.mxu0 0
          %715 = vmatprep.subr.bf16.mxu0 0
          %716 = vmatpush2.bf16.xpose.msra.mxu0 0
          %717 = vmatprep.subr.bf16.mxu0 0
          %718 = vmatpush2.bf16.xpose.msra.mxu0 0
          %719 = vmatprep.mubr.bf16.mxu0 0
          %720 = vmatmul.mubr.bf16.gmra.mxu0 %v682
          %v721 = vpop.f32.mrf.mxu0
          %v722 = vadd.f32 0.0, %v721
          %v723 = vpop.f32.mrf.mxu0
          %v724 = vpop.f32.mrf.mxu0
          %v725 = vpop.f32.mrf.mxu0
          %726 = vdwg.mxu0
          %v727 = vsel %vm676, %v722, -1e+30
          %v728 = vld [vmem:[#allocation3] sm:$0xff]
          %vm729 = vcmask 64512
          %v730 = vsel %vm729, %v727, -inf
          %731 = vmax.xlane.f32.xlu0 %v730
          %v732 = vpop.xlane.xlu0 %731
          %v733 = vmax.f32 %v728, %v732
          %v734 = vsub.f32 %v728, %v733
          %v735 = vmul.f32 %v734, 1.442695
          %v736 = vpow.pop %v735
          %738 = vset.pattern.permute.xlu0 0
          %739 = vperm.xlu0 %738, %v733
          %v740 = vpop.permute.xlu0 %739
          %v742 = vsub.f32 %v727, %v740
          %v743 = vmul.f32 %v742, 1.442695
          %v744 = vpow.pop %v743
          %v745 = vld [vmem:[#allocation4] sm:$0xff]
          %v746 = vmul.f32 %v736, %v745
          %v747 = vsel %vm729, %v744, 0.0
          %748 = vadd.xlane.f32.xlu0 %v747
          %v749 = vpop.xlane.xlu0 %748
          %v750 = vadd.f32 %v746, %v749
          %vm751 = vcmask 7168
          %752 = vst.msk [vmem:[#allocation4] sm:$0xff] %vm751, %v750
          %v753 = vld [vmem:[#allocation5] sm:$0xff]
          %755 = vset.pattern.permute.xlu0 0
          %756 = vperm.xlu0 %755, %v736
          %v757 = vpop.permute.xlu0 %756
          %v759 = vmul.f32 %v757, %v753
          %v760 = vpack.c.bf16 %v744, %v744
          %762 = vrot.lane.b32.xlu0 %v679, 96
          %v763 = vpop.permute.xlu0 %762
          %v765 = vsel %vm729, %v760, 0
          %vm767 = vcmask 1043456
          %v769 = vsel %vm767, %v763, 0
          %771 = vmatprep.subr.bf16.mxu0 0
          %772 = vmatpush1.bf16.msra.mxu0 0
          %773 = vmatprep.subr.bf16.mxu0 0
          %774 = vmatpush1.bf16.msra.mxu0 0
          %775 = vmatprep.subr.bf16.mxu0 0
          %776 = vmatpush1.bf16.msra.mxu0 0
          %777 = vmatprep.subr.bf16.mxu0 0
          %778 = vmatpush1.bf16.msra.mxu0 0
          %779 = vmatprep.subr.bf16.mxu0 0
          %780 = vmatpush1.bf16.msra.mxu0 0
          %781 = vmatprep.subr.bf16.mxu0 0
          %782 = vmatpush1.bf16.msra.mxu0 0
          %783 = vmatprep.subr.bf16.mxu0 0
          %784 = vmatpush1.bf16.msra.mxu0 0
          %785 = vmatprep.subr.bf16.mxu0 0
          %786 = vmatpush1.bf16.msra.mxu0 %v769
          %787 = vmatprep.subr.bf16.mxu0 0
          %788 = vmatpush2.bf16.msra.mxu0 0
          %789 = vmatprep.subr.bf16.mxu0 0
          %790 = vmatpush2.bf16.msra.mxu0 0
          %791 = vmatprep.subr.bf16.mxu0 0
          %792 = vmatpush2.bf16.msra.mxu0 0
          %793 = vmatprep.subr.bf16.mxu0 0
          %794 = vmatpush2.bf16.msra.mxu0 0
          %795 = vmatprep.subr.bf16.mxu0 0
          %796 = vmatpush2.bf16.msra.mxu0 0
          %797 = vmatprep.subr.bf16.mxu0 0
          %798 = vmatpush2.bf16.msra.mxu0 0
          %799 = vmatprep.subr.bf16.mxu0 0
          %800 = vmatpush2.bf16.msra.mxu0 0
          %801 = vmatprep.subr.bf16.mxu0 0
          %802 = vmatpush2.bf16.msra.mxu0 0
          %803 = vmatprep.mubr.bf16.mxu0 0
          %804 = vmatmul.mubr.bf16.gmra.mxu0 %v765
          %v805 = vpop.f32.mrf.mxu0
          %v806 = vadd.f32 0.0, %v805
          %v807 = vpop.f32.mrf.mxu0
          %v808 = vpop.f32.mrf.mxu0
          %v809 = vpop.f32.mrf.mxu0
          %810 = vdwg.mxu0
          %v811 = vadd.f32 %v759, %v806
          %812 = vst.msk [vmem:[#allocation5] sm:$0xff] %vm680, %v811
          %813 = vst.msk [vmem:[#allocation3] sm:$0xff] %vm751, %v733
          %815 = vrot.lane.b32.xlu0 %v678, 112
          %v816 = vpop.permute.xlu0 %815
          %817 = vrot.lane.b32.xlu0 %v679, 112
          %v818 = vpop.permute.xlu0 %817
          %v820 = vsel %vm680, %v816, 0
          %v823 = vsel %vm680, %v818, 0
          %825 = vmatprep.subr.bf16.mxu0 0
          %826 = vmatpush1.bf16.xpose.msra.mxu0 0
          %827 = vmatprep.subr.bf16.mxu0 0
          %828 = vmatpush1.bf16.xpose.msra.mxu0 0
          %829 = vmatprep.subr.bf16.mxu0 0
          %830 = vmatpush1.bf16.xpose.msra.mxu0 0
          %831 = vmatprep.subr.bf16.mxu0 0
          %832 = vmatpush1.bf16.xpose.msra.mxu0 0
          %833 = vmatprep.subr.bf16.mxu0 0
          %834 = vmatpush1.bf16.xpose.msra.mxu0 0
          %835 = vmatprep.subr.bf16.mxu0 0
          %836 = vmatpush1.bf16.xpose.msra.mxu0 0
          %837 = vmatprep.subr.bf16.mxu0 0
          %838 = vmatpush1.bf16.xpose.msra.mxu0 0
          %839 = vmatprep.subr.bf16.mxu0 0
          %840 = vmatpush1.bf16.xpose.msra.mxu0 %v823
          %841 = vmatprep.subr.bf16.mxu0 0
          %842 = vmatpush2.bf16.xpose.msra.mxu0 0
          %843 = vmatprep.subr.bf16.mxu0 0
          %844 = vmatpush2.bf16.xpose.msra.mxu0 0
          %845 = vmatprep.subr.bf16.mxu0 0
          %846 = vmatpush2.bf16.xpose.msra.mxu0 0
          %847 = vmatprep.subr.bf16.mxu0 0
          %848 = vmatpush2.bf16.xpose.msra.mxu0 0
          %849 = vmatprep.subr.bf16.mxu0 0
          %850 = vmatpush2.bf16.xpose.msra.mxu0 0
          %851 = vmatprep.subr.bf16.mxu0 0
          %852 = vmatpush2.bf16.xpose.msra.mxu0 0
          %853 = vmatprep.subr.bf16.mxu0 0
          %854 = vmatpush2.bf16.xpose.msra.mxu0 0
          %855 = vmatprep.subr.bf16.mxu0 0
          %856 = vmatpush2.bf16.xpose.msra.mxu0 0
          %857 = vmatprep.mubr.bf16.mxu0 0
          %858 = vmatmul.mubr.bf16.gmra.mxu0 %v820
          %v859 = vpop.f32.mrf.mxu0
          %v860 = vadd.f32 0.0, %v859
          %v861 = vpop.f32.mrf.mxu0
          %v862 = vpop.f32.mrf.mxu0
          %v863 = vpop.f32.mrf.mxu0
          %864 = vdwg.mxu0
          %v865 = vsel %vm676, %v860, -1e+30
          %s866 = scalar_lea.vmem [#allocation3], 8
          %v867 = vld [vmem:[%s866] sm:$0xff]
          %v868 = vsel %vm729, %v865, -inf
          %869 = vmax.xlane.f32.xlu0 %v868
          %v870 = vpop.xlane.xlu0 %869
          %v871 = vmax.f32 %v867, %v870
          %v872 = vsub.f32 %v867, %v871
          %v873 = vmul.f32 %v872, 1.442695
          %v874 = vpow.pop %v873
          %876 = vset.pattern.permute.xlu0 0
          %877 = vperm.xlu0 %876, %v871
          %v878 = vpop.permute.xlu0 %877
          %v880 = vsub.f32 %v865, %v878
          %v881 = vmul.f32 %v880, 1.442695
          %v882 = vpow.pop %v881
          %s883 = scalar_lea.vmem [#allocation4], 8
          %v884 = vld [vmem:[%s883] sm:$0xff]
          %v885 = vmul.f32 %v874, %v884
          %v886 = vsel %vm729, %v882, 0.0
          %887 = vadd.xlane.f32.xlu0 %v886
          %v888 = vpop.xlane.xlu0 %887
          %v889 = vadd.f32 %v885, %v888
          %890 = vst.msk [vmem:[%s883] sm:$0xff] %vm751, %v889
          %v891 = vld [vmem:[#allocation5] sm:$0xff]
          %893 = vset.pattern.permute.xlu0 0
          %894 = vperm.xlu0 %893, %v874
          %v895 = vpop.permute.xlu0 %894
          %v897 = vmul.f32 %v895, %v891
          %v898 = vpack.c.bf16 %v882, %v882
          %899 = vrot.lane.b32.xlu0 %v679, 80
          %v900 = vpop.permute.xlu0 %899
          %v902 = vsel %vm729, %v898, 0
          %v905 = vsel %vm767, %v900, 0
          %907 = vmatprep.subr.bf16.mxu0 0
          %908 = vmatpush1.bf16.msra.mxu0 0
          %909 = vmatprep.subr.bf16.mxu0 0
          %910 = vmatpush1.bf16.msra.mxu0 0
          %911 = vmatprep.subr.bf16.mxu0 0
          %912 = vmatpush1.bf16.msra.mxu0 0
          %913 = vmatprep.subr.bf16.mxu0 0
          %914 = vmatpush1.bf16.msra.mxu0 0
          %915 = vmatprep.subr.bf16.mxu0 0
          %916 = vmatpush1.bf16.msra.mxu0 0
          %917 = vmatprep.subr.bf16.mxu0 0
          %918 = vmatpush1.bf16.msra.mxu0 0
          %919 = vmatprep.subr.bf16.mxu0 0
          %920 = vmatpush1.bf16.msra.mxu0 0
          %921 = vmatprep.subr.bf16.mxu0 0
          %922 = vmatpush1.bf16.msra.mxu0 %v905
          %923 = vmatprep.subr.bf16.mxu0 0
          %924 = vmatpush2.bf16.msra.mxu0 0
          %925 = vmatprep.subr.bf16.mxu0 0
          %926 = vmatpush2.bf16.msra.mxu0 0
          %927 = vmatprep.subr.bf16.mxu0 0
          %928 = vmatpush2.bf16.msra.mxu0 0
          %929 = vmatprep.subr.bf16.mxu0 0
          %930 = vmatpush2.bf16.msra.mxu0 0
          %931 = vmatprep.subr.bf16.mxu0 0
          %932 = vmatpush2.bf16.msra.mxu0 0
          %933 = vmatprep.subr.bf16.mxu0 0
          %934 = vmatpush2.bf16.msra.mxu0 0
          %935 = vmatprep.subr.bf16.mxu0 0
          %936 = vmatpush2.bf16.msra.mxu0 0
          %937 = vmatprep.subr.bf16.mxu0 0
          %938 = vmatpush2.bf16.msra.mxu0 0
          %939 = vmatprep.mubr.bf16.mxu0 0
          %940 = vmatmul.mubr.bf16.gmra.mxu0 %v902
          %v941 = vpop.f32.mrf.mxu0
          %v942 = vadd.f32 0.0, %v941
          %v943 = vpop.f32.mrf.mxu0
          %v944 = vpop.f32.mrf.mxu0
          %v945 = vpop.f32.mrf.mxu0
          %946 = vdwg.mxu0
          %948 = vrot.lane.b32.xlu0 %v942, 16
          %v949 = vpop.permute.xlu0 %948
          %v951 = vadd.f32 %v897, %v949
          %vm952 = vcmask 261248
          %953 = vst.msk [vmem:[#allocation5] sm:$0xff] %vm952, %v951
          %954 = vst.msk [vmem:[%s866] sm:$0xff] %vm751, %v871
        $region80: #{tpu_custom_call.1} parent=71 // pred_fallthru
          _
        // Predicated region
        $region81: #{tpu_custom_call.1} parent=71 // pred_check
          %p955 = pneg %p497
        $region82: #{tpu_custom_call.1} parent=71 // pred_check_branch
          %957 = sbr.rel (%p955) target = $region84
        $region83: #{tpu_custom_call.1} parent=71 // pred_region
          %v958 = vld [vmem:[#allocation5] sm:$0xff]
          %v959 = vld [vmem:[#allocation4] sm:$0xff]
          %v960 = vrcp.pop %v959
          %962 = vset.pattern.permute.xlu0 0
          %963 = vperm.xlu0 %962, %v960
          %v964 = vpop.permute.xlu0 %963
          %v966 = vmul.f32 %v958, %v964
          %vm967 = vcmask 130048
          %968 = vst.msk [vmem:[#allocation5] sm:$0xff] %vm967, %v966
          %v969 = vld [vmem:[#allocation5] sm:$0xff]
          %s970 = scalar_lea.vmem [#allocation4], 8
          %v971 = vld [vmem:[%s970] sm:$0xff]
          %v972 = vrcp.pop %v971
          %974 = vset.pattern.permute.xlu0 0
          %975 = vperm.xlu0 %974, %v972
          %v976 = vpop.permute.xlu0 %975
          %v978 = vmul.f32 %v969, %v976
          %vm979 = vcmask 261248
          %980 = vst.msk [vmem:[#allocation5] sm:$0xff] %vm979, %v978
          %v981 = vld [vmem:[#allocation5] sm:$0xff]
          %v982 = vld [vmem:[%s4] sm:$0xf]
          %v983 = vld [vmem:[%s4 + $0x4] sm:$0xf]
          %v984 = vld [vmem:[%s4 + $0x8] sm:$0xf]
          %v985 = vld [vmem:[%s4 + $0xc] sm:$0xf]
          %v986 = vpack.c.bf16 %v981, %v981
          %v991 = vunpack.c.l.b16 %v982
          %v992 = vunpack.c.l.b16 %v983
          %v993 = vunpack.c.l.b16 %v984
          %v994 = vunpack.c.l.b16 %v985
          %v995 = vpack.c.b16 %v992, %v991
          %v996 = vpack.c.b16 %v994, %v993
          %vm997 = vcmask 261120
          %v999 = vsel %vm997, %v986, 0
          %v1002 = vsel %vm997, %v995, 0
          %v1005 = vsel %vm997, %v996, 0
          %1007 = vmatprep.subr.bf16.mxu0 0
          %1008 = vmatpush1.bf16.xpose.msra.mxu0 0
          %1009 = vmatprep.subr.bf16.mxu0 0
          %1010 = vmatpush1.bf16.xpose.msra.mxu0 0
          %1011 = vmatprep.subr.bf16.mxu0 0
          %1012 = vmatpush1.bf16.xpose.msra.mxu0 0
          %1013 = vmatprep.subr.bf16.mxu0 0
          %1014 = vmatpush1.bf16.xpose.msra.mxu0 0
          %1015 = vmatprep.subr.bf16.mxu0 0
          %1016 = vmatpush1.bf16.xpose.msra.mxu0 0
          %1017 = vmatprep.subr.bf16.mxu0 0
          %1018 = vmatpush1.bf16.xpose.msra.mxu0 0
          %1019 = vmatprep.subr.bf16.mxu0 0
          %1020 = vmatpush1.bf16.xpose.msra.mxu0 %v1005
          %1021 = vmatprep.subr.bf16.mxu0 0
          %1022 = vmatpush1.bf16.xpose.msra.mxu0 %v1002
          %1023 = vmatprep.subr.bf16.mxu0 0
          %1024 = vmatpush2.bf16.xpose.msra.mxu0 0
          %1025 = vmatprep.subr.bf16.mxu0 0
          %1026 = vmatpush2.bf16.xpose.msra.mxu0 0
          %1027 = vmatprep.subr.bf16.mxu0 0
          %1028 = vmatpush2.bf16.xpose.msra.mxu0 0
          %1029 = vmatprep.subr.bf16.mxu0 0
          %1030 = vmatpush2.bf16.xpose.msra.mxu0 0
          %1031 = vmatprep.subr.bf16.mxu0 0
          %1032 = vmatpush2.bf16.xpose.msra.mxu0 0
          %1033 = vmatprep.subr.bf16.mxu0 0
          %1034 = vmatpush2.bf16.xpose.msra.mxu0 0
          %1035 = vmatprep.subr.bf16.mxu0 0
          %1036 = vmatpush2.bf16.xpose.msra.mxu0 0
          %1037 = vmatprep.subr.bf16.mxu0 0
          %1038 = vmatpush2.bf16.xpose.msra.mxu0 0
          %1039 = vmatprep.mubr.bf16.mxu0 0
          %1040 = vmatmul.mubr.bf16.gmra.mxu0 %v999
          %v1041 = vpop.f32.mrf.mxu0
          %v1042 = vadd.f32 0.0, %v1041
          %v1043 = vpop.f32.mrf.mxu0
          %v1044 = vpop.f32.mrf.mxu0
          %v1045 = vpop.f32.mrf.mxu0
          %1046 = vdwg.mxu0
          %v1047 = vld [vmem:[%s488] sm:$0xff]
          %v1048 = vadd.f32 %v1047, %v1042
          %v1049 = vld [vmem:[%s9] sm:$0x1]
          %v1050 = vld [vmem:[%s10] sm:$0x1]
          %v1051 = vsel %vm997, %v1048, 0.0
          %1052 = vadd.xlane.f32.xlu0 %v1051
          %v1053 = vpop.xlane.xlu0 %1052
          %v1054 = vrcp.pop 32.0
          %v1055 = vmul.f32 %v1053, %v1054
          %v1056 = vsub.f32 %v1048, %v1055
          %v1057 = vmul.f32 %v1056, %v1056
          %v1058 = vsel %vm997, %v1057, 0.0
          %1059 = vadd.xlane.f32.xlu0 %v1058
          %v1060 = vpop.xlane.xlu0 %1059
          %v1061 = vmul.f32 %v1060, %v1054
          %v1062 = vadd.f32 %v1061, 1e-05
          %v1063 = vrsqrt.pop %v1062
          %v1064 = vmul.f32 %v1056, %v1063
          %v1066 = vlaneseq
          %v1067 = vshrl.u32 %v1066, 7
          %v1068 = vsub.s32 0, %v1067
          %v1069 = vrot.slane %v1049, %v1068
          %v1071 = vmul.f32 %v1064, %v1069
          %v1073 = vlaneseq
          %v1074 = vshrl.u32 %v1073, 7
          %v1075 = vsub.s32 0, %v1074
          %v1076 = vrot.slane %v1050, %v1075
          %v1078 = vadd.f32 %v1071, %v1076
          %v1079 = vld [vmem:[%s6] sm:$0x1]
          %v1080 = vld [vmem:[%s5] sm:$0xf]
          %v1081 = vld [vmem:[%s5 + $0x4] sm:$0xf]
          %v1082 = vld [vmem:[%s5 + $0x8] sm:$0xf]
          %v1083 = vld [vmem:[%s5 + $0xc] sm:$0xf]
          %v1084 = vld [vmem:[%s5 + $0x10] sm:$0xf]
          %v1085 = vld [vmem:[%s5 + $0x14] sm:$0xf]
          %v1086 = vld [vmem:[%s5 + $0x18] sm:$0xf]
          %v1087 = vld [vmem:[%s5 + $0x1c] sm:$0xf]
          %v1088 = vpack.c.bf16 %v1078, %v1078
          %v1090 = vlaneseq
          %v1091 = vshrl.u32 %v1090, 7
          %v1092 = vsub.s32 0, %v1091
          %v1093 = vrot.slane %v1079, %v1092
          %v1103 = vunpack.c.l.b16 %v1080
          %v1104 = vunpack.c.l.b16 %v1081
          %v1105 = vunpack.c.l.b16 %v1082
          %v1106 = vunpack.c.l.b16 %v1083
          %v1107 = vunpack.c.l.b16 %v1084
          %v1108 = vunpack.c.l.b16 %v1085
          %v1109 = vunpack.c.l.b16 %v1086
          %v1110 = vunpack.c.l.b16 %v1087
          %v1111 = vpack.c.b16 %v1104, %v1103
          %v1112 = vpack.c.b16 %v1106, %v1105
          %v1113 = vpack.c.b16 %v1108, %v1107
          %v1114 = vpack.c.b16 %v1110, %v1109
          %v1116 = vsel %vm997, %v1088, 0
          %v1119 = vsel %vm997, %v1111, 0
          %v1122 = vsel %vm997, %v1112, 0
          %v1125 = vsel %vm997, %v1113, 0
          %v1128 = vsel %vm997, %v1114, 0
          %1130 = vmatprep.subr.bf16.mxu0 0
          %1131 = vmatpush1.bf16.xpose.msra.mxu0 0
          %1132 = vmatprep.subr.bf16.mxu0 0
          %1133 = vmatpush1.bf16.xpose.msra.mxu0 0
          %1134 = vmatprep.subr.bf16.mxu0 0
          %1135 = vmatpush1.bf16.xpose.msra.mxu0 0
          %1136 = vmatprep.subr.bf16.mxu0 0
          %1137 = vmatpush1.bf16.xpose.msra.mxu0 0
          %1138 = vmatprep.subr.bf16.mxu0 0
          %1139 = vmatpush1.bf16.xpose.msra.mxu0 %v1128
          %1140 = vmatprep.subr.bf16.mxu0 0
          %1141 = vmatpush1.bf16.xpose.msra.mxu0 %v1125
          %1142 = vmatprep.subr.bf16.mxu0 0
          %1143 = vmatpush1.bf16.xpose.msra.mxu0 %v1122
          %1144 = vmatprep.subr.bf16.mxu0 0
          %1145 = vmatpush1.bf16.xpose.msra.mxu0 %v1119
          %1146 = vmatprep.subr.bf16.mxu0 0
          %1147 = vmatpush2.bf16.xpose.msra.mxu0 0
          %1148 = vmatprep.subr.bf16.mxu0 0
          %1149 = vmatpush2.bf16.xpose.msra.mxu0 0
          %1150 = vmatprep.subr.bf16.mxu0 0
          %1151 = vmatpush2.bf16.xpose.msra.mxu0 0
          %1152 = vmatprep.subr.bf16.mxu0 0
          %1153 = vmatpush2.bf16.xpose.msra.mxu0 0
          %1154 = vmatprep.subr.bf16.mxu0 0
          %1155 = vmatpush2.bf16.xpose.msra.mxu0 0
          %1156 = vmatprep.subr.bf16.mxu0 0
          %1157 = vmatpush2.bf16.xpose.msra.mxu0 0
          %1158 = vmatprep.subr.bf16.mxu0 0
          %1159 = vmatpush2.bf16.xpose.msra.mxu0 0
          %1160 = vmatprep.subr.bf16.mxu0 0
          %1161 = vmatpush2.bf16.xpose.msra.mxu0 0
          %1162 = vmatprep.mubr.bf16.mxu0 0
          %1163 = vmatmul.mubr.bf16.gmra.mxu0 %v1116
          %v1164 = vpop.f32.mrf.mxu0
          %v1165 = vadd.f32 %v1093, %v1164
          %v1166 = vpop.f32.mrf.mxu0
          %v1167 = vpop.f32.mrf.mxu0
          %v1168 = vpop.f32.mrf.mxu0
          %1169 = vdwg.mxu0
          %v1170 = vmul.f32 %v1165, 0.5
          %v1171 = vmul.f32 %v1165, 0.044715
          %v1172 = vmul.f32 %v1171, %v1165
          %v1173 = vmul.f32 %v1172, %v1165
          %v1174 = vadd.f32 %v1165, %v1173
          %v1175 = vmul.f32 %v1174, 0.7978846
          %v1176 = vtanh.pop %v1175
          %v1177 = vadd.f32 %v1176, 1.0
          %v1178 = vmul.f32 %v1170, %v1177
          %v1179 = vld [vmem:[%s7] sm:$0xf]
          %v1180 = vld [vmem:[%s7 + $0x4] sm:$0xf]
          %v1181 = vld [vmem:[%s7 + $0x8] sm:$0xf]
          %v1182 = vld [vmem:[%s7 + $0xc] sm:$0xf]
          %v1183 = vpack.c.bf16 %v1178, %v1178
          %v1184 = vld [vmem:[%s8] sm:$0x1]
          %v1186 = vlaneseq
          %v1187 = vshrl.u32 %v1186, 7
          %v1188 = vsub.s32 0, %v1187
          %v1189 = vrot.slane %v1184, %v1188
          %v1195 = vunpack.c.l.b16 %v1179
          %v1196 = vunpack.c.l.b16 %v1180
          %v1197 = vunpack.c.l.b16 %v1181
          %v1198 = vunpack.c.l.b16 %v1182
          %v1199 = vpack.c.b16 %v1196, %v1195
          %v1200 = vpack.c.b16 %v1198, %v1197
          %vm1201 = vcmask 523264
          %v1203 = vsel %vm1201, %v1183, 0
          %v1206 = vsel %vm1201, %v1199, 0
          %v1209 = vsel %vm1201, %v1200, 0
          %1211 = vmatprep.subr.bf16.mxu0 0
          %1212 = vmatpush1.bf16.xpose.msra.mxu0 0
          %1213 = vmatprep.subr.bf16.mxu0 0
          %1214 = vmatpush1.bf16.xpose.msra.mxu0 0
          %1215 = vmatprep.subr.bf16.mxu0 0
          %1216 = vmatpush1.bf16.xpose.msra.mxu0 0
          %1217 = vmatprep.subr.bf16.mxu0 0
          %1218 = vmatpush1.bf16.xpose.msra.mxu0 0
          %1219 = vmatprep.subr.bf16.mxu0 0
          %1220 = vmatpush1.bf16.xpose.msra.mxu0 0
          %1221 = vmatprep.subr.bf16.mxu0 0
          %1222 = vmatpush1.bf16.xpose.msra.mxu0 0
          %1223 = vmatprep.subr.bf16.mxu0 0
          %1224 = vmatpush1.bf16.xpose.msra.mxu0 %v1209
          %1225 = vmatprep.subr.bf16.mxu0 0
          %1226 = vmatpush1.bf16.xpose.msra.mxu0 %v1206
          %1227 = vmatprep.subr.bf16.mxu0 0
          %1228 = vmatpush2.bf16.xpose.msra.mxu0 0
          %1229 = vmatprep.subr.bf16.mxu0 0
          %1230 = vmatpush2.bf16.xpose.msra.mxu0 0
          %1231 = vmatprep.subr.bf16.mxu0 0
          %1232 = vmatpush2.bf16.xpose.msra.mxu0 0
          %1233 = vmatprep.subr.bf16.mxu0 0
          %1234 = vmatpush2.bf16.xpose.msra.mxu0 0
          %1235 = vmatprep.subr.bf16.mxu0 0
          %1236 = vmatpush2.bf16.xpose.msra.mxu0 0
          %1237 = vmatprep.subr.bf16.mxu0 0
          %1238 = vmatpush2.bf16.xpose.msra.mxu0 0
          %1239 = vmatprep.subr.bf16.mxu0 0
          %1240 = vmatpush2.bf16.xpose.msra.mxu0 0
          %1241 = vmatprep.subr.bf16.mxu0 0
          %1242 = vmatpush2.bf16.xpose.msra.mxu0 0
          %1243 = vmatprep.mubr.bf16.mxu0 0
          %1244 = vmatmul.mubr.bf16.gmra.mxu0 %v1203
          %v1245 = vpop.f32.mrf.mxu0
          %v1246 = vadd.f32 %v1189, %v1245
          %v1247 = vpop.f32.mrf.mxu0
          %v1248 = vpop.f32.mrf.mxu0
          %v1249 = vpop.f32.mrf.mxu0
          %1250 = vdwg.mxu0
          %v1251 = vadd.f32 %v1078, %v1246
          %v1252 = vld [vmem:[%s11] sm:$0x1]
          %v1253 = vld [vmem:[%s12] sm:$0x1]
          %v1254 = vsel %vm997, %v1251, 0.0
          %1255 = vadd.xlane.f32.xlu0 %v1254
          %v1256 = vpop.xlane.xlu0 %1255
          %v1257 = vmul.f32 %v1256, %v1054
          %v1258 = vsub.f32 %v1251, %v1257
          %v1259 = vmul.f32 %v1258, %v1258
          %v1260 = vsel %vm997, %v1259, 0.0
          %1261 = vadd.xlane.f32.xlu0 %v1260
          %v1262 = vpop.xlane.xlu0 %1261
          %v1263 = vmul.f32 %v1262, %v1054
          %v1264 = vadd.f32 %v1263, 1e-05
          %v1265 = vrsqrt.pop %v1264
          %v1266 = vmul.f32 %v1258, %v1265
          %v1268 = vlaneseq
          %v1269 = vshrl.u32 %v1268, 7
          %v1270 = vsub.s32 0, %v1269
          %v1271 = vrot.slane %v1252, %v1270
          %v1273 = vmul.f32 %v1266, %v1271
          %v1275 = vlaneseq
          %v1276 = vshrl.u32 %v1275, 7
          %v1277 = vsub.s32 0, %v1276
          %v1278 = vrot.slane %v1253, %v1277
          %v1280 = vadd.f32 %v1273, %v1278
          %1281 = vst.msk [vmem:[%s481] sm:$0xff] %vm997, %v1280
        $region84: #{tpu_custom_call.1} parent=71 // pred_fallthru
          _
        %s1282 = sand.u32 %s343, 1
        %s1283 = scalar_lea.sflag [#allocation7], %s1282
        %s1284 = sand.u32 %s343, 1
        %s1285 = smul.addr %s1284, 8
        %s1286 = scalar_lea.vmem [#allocation6], %s1285
        // Predicated region
        $region85: #{tpu_custom_call.1} parent=71 // pred_check
          %p1287 = pneg %p353
        $region86: #{tpu_custom_call.1} parent=71 // pred_check_branch
          %1289 = sbr.rel (%p1287) target = $region88
        $region87: #{tpu_custom_call.1} parent=71 // pred_region
          %s1291 = ssub.s32 128, 128
          %1292 = vsyncadd %s1283, %s1291
          %s1293 = sadd.s32 %s33, %s32
          %s1294 = smul.addr %s1293, 128
          %s1295 = scalar_lea.hbm %s13, %s1294
          %s1297 = sshll.u32 %s1286, 4
          %s1298 = int_to_ptr.vmem [resolvable:$true] %s1297
          %1300 = dma.vmem_to_hbm [thread:$0]  %s1298, 128, %s1295, %s1283
        $region88: #{tpu_custom_call.1} parent=71 // pred_fallthru
          _
      $region72: #{tpu_custom_call.1} parent=5 // pred_fallthru
        _
      %p1301 = scmp.le.s32.totalorder 2, %s22
      // Predicated region
      $region89: #{tpu_custom_call.1} parent=5 // pred_check
        %p1302 = pneg %p1301
      $region90: #{tpu_custom_call.1} parent=5 // pred_check_branch
        %1304 = sbr.rel (%p1302) target = $region92
      $region91: #{tpu_custom_call.1} parent=5 // pred_region
        %s1305 = ssub.s32 %s22, 2
        // Predicated region
        $region93: #{tpu_custom_call.1} parent=91 // pred_check
          %p1306 = pneg %p359
        $region94: #{tpu_custom_call.1} parent=91 // pred_check_branch
          %1308 = sbr.rel (%p1306) target = $region96
        $region95: #{tpu_custom_call.1} parent=91 // pred_region
          %s1309 = sand.u32 %s344, 1
          %s1310 = scalar_lea.sflag [#allocation7], %s1309
          %s1311 = sand.u32 %s344, 1
          %s1312 = smul.addr %s1311, 8
          %s1313 = scalar_lea.vmem [#allocation6], %s1312
          %1314 = dma.done %s1310, 128
        $region96: #{tpu_custom_call.1} parent=91 // pred_fallthru
          _
      $region92: #{tpu_custom_call.1} parent=5 // pred_fallthru
        _
    $region6: #{tpu_custom_call.1} parent=1 // loop_footer
      %s26 = sadd.s32 1, %s22
    $region7: #{tpu_custom_call.1} parent=1 // loop_footer_branch
      %21 = sbr.rel target = $region3
    $region8: #{tpu_custom_call.1} parent=1 // loop_exit
      _
    %1315 = vsyncpa [#allocation7], 1
    %s1316 = scalar_lea.sflag [#allocation7], 1
    %1317 = vsyncpa %s1316, 1

</llo_original>
